<compile_context>
chip_gen: v5e
topology: v5e:2x2
jax: 0.10.0
libtpu: 0.0.40
codegen_flags: <defaults>
</compile_context>

<pallas_src>
import functools
import math

import jax
import jax.numpy as jnp
from jax import lax
from jax.experimental import pallas as pl
from jax.experimental.pallas import tpu as pltpu


def _round_up(x, m):
    return (x + m - 1) // m * m


# --------------------------------------------------------------------------
# Pass 1: conv (K accumulated MXU matmuls over a halo'd tile) + bias,
#         emits z (bf16) and per-tile partial BN statistics.
# --------------------------------------------------------------------------
def _conv_stats_kernel(x_ref, xh_ref, w_ref, b_ref, z_ref, s_ref, *,
                       k_taps, pad, c_in, c_out, tile_l, l_valid):
    """x_ref:  (1, T, Cin)   bf16  main activation tile (rows t*T .. t*T+T)
       xh_ref: (1, H, Cin)   bf16  halo rows t*T+T .. t*T+T+H of the same array
       w_ref:  (K*Cin, Cout) bf16  tap-major conv weight
       b_ref:  (1, Cout)     f32   conv bias
       z_ref:  (1, T, Cout)  bf16  pre-BN conv output tile
       s_ref:  (1, 1, 8, Cout) f32 rows 0/1 = partial sum / sum of squares."""
    t = pl.program_id(1)

    xm = x_ref[0]                                        # (T, Cin) bf16
    if pad > 0:
        xa = jnp.concatenate([xm, xh_ref[0][:2 * pad]], axis=0)
    else:
        xa = xm

    # K tap-shifted MXU matmuls, f32 accumulation.  y[l] = sum_k x[l+k-pad]@W[k]
    acc = jnp.zeros((tile_l, c_out), jnp.float32)
    for k in range(k_taps):
        acc = acc + jnp.dot(xa[k:k + tile_l, :],
                            w_ref[k * c_in:(k + 1) * c_in, :],
                            preferred_element_type=jnp.float32)
    z = acc + b_ref[...]                                 # conv bias (1, Cout)
    z_ref[0] = z.astype(z_ref.dtype)                     # bf16 round trip

    # Partial BN statistics.  Rows past the true L (zero-padded tail of the
    # last tile) are masked so the batch stats match PyTorch training mode.
    if l_valid % tile_l:
        row = t * tile_l + lax.broadcasted_iota(jnp.int32, (tile_l, 1), 0)
        zm = jnp.where(row < l_valid, z, 0.0)
    else:
        zm = z
    ssum = jnp.sum(zm, axis=0, keepdims=True)
    ssq = jnp.sum(zm * zm, axis=0, keepdims=True)
    s_ref[0, 0] = jnp.concatenate(
        [ssum, ssq, jnp.zeros((6, c_out), jnp.float32)], axis=0)


# --------------------------------------------------------------------------
# Pass 2: y = relu(z * scale + shift), bf16 in / bf16 out, f32 math.
# --------------------------------------------------------------------------
def _bn_relu_kernel(z_ref, sc_ref, sh_ref, o_ref):
    y = z_ref[...].astype(jnp.float32) * sc_ref[...] + sh_ref[...]
    o_ref[...] = jnp.maximum(y, 0.0).astype(o_ref.dtype)


def unet_layer(x, w2d, bias, gamma, beta, *, kernel_size, eps=1e-5,
               tile_l=1024):
    """One Conv1d + BatchNorm1d(train) + ReLU layer on channel-padded bf16
    activations.  x: (N, L, Cin_pad) bf16 -> (N, L, Cout_pad) bf16."""
    N, L, c_in = x.shape
    K = kernel_size
    pad = (K - 1) // 2
    kc, c_out = w2d.shape
    assert kc == K * c_in, "weight / activation channel mismatch"

    # Halo block height: multiple of 8 sublanes covering the 2*pad extra rows.
    H = 8 * max(1, pl.cdiv(2 * pad, 8))
    # L tile: multiple of lcm(H, 16) so halo block offsets are exact block
    # indices and bf16 sublane packing stays aligned.
    m = (H * 16) // math.gcd(H, 16)
    T = _round_up(max(min(tile_l, _round_up(L, 128)), m), m)
    n_t = pl.cdiv(L, T)
    L_pad = n_t * T

    # Per-batch zero padding: [pad left halo][L data][zeros up to L_pad + H].
    right = L_pad - L + H - pad
    A = jnp.pad(x, ((0, 0), (pad, right), (0, 0)))       # (N, L_pad + H, Cin)

    kernel = functools.partial(
        _conv_stats_kernel, k_taps=K, pad=pad, c_in=c_in, c_out=c_out,
        tile_l=T, l_valid=L)

    z, stats = pl.pallas_call(
        kernel,
        out_shape=(jax.ShapeDtypeStruct((N, L_pad, c_out), jnp.bfloat16),
                   jax.ShapeDtypeStruct((N, n_t, 8, c_out), jnp.float32)),
        grid=(N, n_t),
        in_specs=[
            pl.BlockSpec((1, T, c_in), lambda n, t: (n, t, 0)),
            # Halo = first H rows of the next tile of the SAME padded array.
            pl.BlockSpec((1, H, c_in),
                         lambda n, t, _q=T // H: (n, (t + 1) * _q, 0)),
            pl.BlockSpec((K * c_in, c_out), lambda n, t: (0, 0)),
            pl.BlockSpec((1, c_out), lambda n, t: (0, 0)),
        ],
        out_specs=(
            pl.BlockSpec((1, T, c_out), lambda n, t: (n, t, 0)),
            pl.BlockSpec((1, 1, 8, c_out), lambda n, t: (n, t, 0, 0)),
        ),
        compiler_params=pltpu.CompilerParams(
            dimension_semantics=("parallel", "parallel"),
            vmem_limit_bytes=48 * 1024 * 1024),
    )(A, A, w2d, bias)

    # Tiny XLA reduction: combine per-tile partial sums into global BN stats
    # and fold gamma/beta into a single affine (scale, shift).
    # TODO(synk): switch to a Chan/Welford (mean, M2) merge if N*L gets large
    # enough for the one-pass E[x^2]-E[x]^2 formula to lose f32 precision.
    cnt = jnp.float32(N * L)
    ssum = jnp.sum(stats[:, :, 0, :], axis=(0, 1))
    ssq = jnp.sum(stats[:, :, 1, :], axis=(0, 1))
    mean = ssum / cnt
    var = jnp.maximum(ssq / cnt - mean * mean, 0.0)
    rstd = lax.rsqrt(var + eps)
    scale = (gamma[0] * rstd).reshape(1, c_out)
    shift = (beta[0] - mean * gamma[0] * rstd).reshape(1, c_out)

    rows = N * L_pad
    y = pl.pallas_call(
        _bn_relu_kernel,
        out_shape=jax.ShapeDtypeStruct((rows, c_out), jnp.bfloat16),
        grid=(rows // T,),
        in_specs=[
            pl.BlockSpec((T, c_out), lambda i: (i, 0)),
            pl.BlockSpec((1, c_out), lambda i: (0, 0)),
            pl.BlockSpec((1, c_out), lambda i: (0, 0)),
        ],
        out_specs=pl.BlockSpec((T, c_out), lambda i: (i, 0)),
        compiler_params=pltpu.CompilerParams(
            dimension_semantics=("parallel",),
            vmem_limit_bytes=48 * 1024 * 1024),
    )(z.reshape(rows, c_out), scale, shift)

    # TODO(synk): the slice + next-layer re-pad costs one extra bf16 activation
    # copy per layer; writing pass-2 output directly into the next layer's
    # halo-padded layout needs element-offset output blocks.
    return y.reshape(N, L_pad, c_out)[:, :L, :]


def init_unet_block_params(key, in_channel, out_channel, kernel_size, depth):
    """PyTorch-style init, matching the module literally: every layer is
    Conv1d(in_channel, out_channel) (so depth>1 implies in==out), weight/bias
    ~ U(-1/sqrt(fan_in), +), BN gamma=1, beta=0.  Weight layout (Cout,Cin,K)."""
    params = []
    for _ in range(depth):
        key, kw, kb = jax.random.split(key, 3)
        bound = float((in_channel * kernel_size) ** -0.5)
        w = jax.random.uniform(kw, (out_channel, in_channel, kernel_size),
                               jnp.float32, -bound, bound)
        b = jax.random.uniform(kb, (out_channel,), jnp.float32, -bound, bound)
        params.append((w, b, jnp.ones((out_channel,), jnp.float32),
                       jnp.zeros((out_channel,), jnp.float32)))
    return params


def prepare_params(torch_params):
    """Pad channels to lane-dense multiples of 128 and pre-reshape each conv
    weight into the tap-major (K*Cin_pad, Cout_pad) bf16 layout.
    (256-multiples would fill v6e/v7x MXU tiles, but the kernel is HBM-bound
    and extra padding of small channel counts only wastes bandwidth.)"""
    prepared = []
    for (w_oik, b, gamma, beta) in torch_params:
        c_out, c_in, k = w_oik.shape
        c_in_p = _round_up(c_in, 128)
        c_out_p = _round_up(c_out, 128)
        w_kio = jnp.transpose(w_oik, (2, 1, 0))                 # (K, Cin, Cout)
        w_kio = jnp.pad(w_kio, ((0, 0), (0, c_in_p - c_in),
                                (0, c_out_p - c_out)))
        prepared.append(dict(
            kernel_size=k,
            c_in_pad=c_in_p,
            w2d=w_kio.reshape(k * c_in_p, c_out_p).astype(jnp.bfloat16),
            bias=jnp.pad(b, (0, c_out_p - c_out)).reshape(1, c_out_p),
            gamma=jnp.pad(gamma, (0, c_out_p - c_out)).reshape(1, c_out_p),
            beta=jnp.pad(beta, (0, c_out_p - c_out)).reshape(1, c_out_p),
        ))
    return prepared


def unet_block_forward(x_ncl, prepared_params, out_channel, *, tile_l=1024):
    """UnetBlock.forward.  x_ncl: (N, Cin, L) (PyTorch layout) -> (N, Cout, L)."""
    x = jnp.transpose(x_ncl, (0, 2, 1)).astype(jnp.bfloat16)    # NLC, bf16 first
    c_in = x.shape[-1]
    c_in_pad = prepared_params[0]["c_in_pad"]
    x = jnp.pad(x, ((0, 0), (0, 0), (0, c_in_pad - c_in)))
    for lp in prepared_params:
        x = unet_layer(x, lp["w2d"], lp["bias"], lp["gamma"], lp["beta"],
                       kernel_size=lp["kernel_size"], tile_l=tile_l)
    x = x[..., :out_channel].astype(jnp.float32)
    return jnp.transpose(x, (0, 2, 1))


def _reference_forward(x_ncl, torch_params, eps=1e-5):
    """Pure-JAX reference mirroring the kernel's precision policy: bf16 conv
    inputs with f32 accumulation, f32 BN statistics, bf16 storage of the
    pre-BN activation and of the inter-layer activations."""
    x = x_ncl.astype(jnp.float32)
    for (w_oik, b, gamma, beta) in torch_params:
        pad = (w_oik.shape[2] - 1) // 2
        y = lax.conv_general_dilated(
            x.astype(jnp.bfloat16), w_oik.astype(jnp.bfloat16),
            window_strides=(1,), padding=[(pad, pad)],
            dimension_numbers=("NCH", "OIH", "NCH"),
            preferred_element_type=jnp.float32)
        y = y + b.reshape(1, -1, 1)
        mean = jnp.mean(y, axis=(0, 2), keepdims=True)
        var = jnp.mean((y - mean) ** 2, axis=(0, 2), keepdims=True)
        yq = y.astype(jnp.bfloat16).astype(jnp.float32)         # bf16 z storage
        y = (yq - mean) * lax.rsqrt(var + eps)
        y = y * gamma.reshape(1, -1, 1) + beta.reshape(1, -1, 1)
        x = jnp.maximum(y, 0.0)
        x = x.astype(jnp.bfloat16).astype(jnp.float32)          # bf16 activations
    return x


if __name__ == "__main__":
    # Small shapes consistent with the module: Conv1d input is (N, C, L).
    N, C_in, C_out, L = 2, 4, 4, 16
    kernel_size, depth = 3, 2

    key = jax.random.PRNGKey(0)
    key, kx = jax.random.split(key)
    x = jax.random.normal(kx, (N, C_in, L), jnp.float32)

    torch_params = init_unet_block_params(key, C_in, C_out, kernel_size, depth)
    params = prepare_params(torch_params)

    fwd = jax.jit(lambda v: unet_block_forward(v, params, C_out))
    out = jax.block_until_ready(fwd(x))
    ref = jax.block_until_ready(_reference_forward(x, torch_params))
    assert out.shape == (N, C_out, L)
    err = float(jnp.max(jnp.abs(out - ref)))
    assert err < 2e-2, f"Pallas kernel mismatch vs reference: {err}"

    # Second case: multiple L tiles per batch item -> exercises the halo block
    # across tile boundaries, the masked tail tile, and the partial-stat merge.
    key, kx2 = jax.random.split(key)
    L2 = 300                                    # tile_l=128 -> 3 tiles per batch
    x2 = jax.random.normal(kx2, (N, C_in, L2), jnp.float32)
    fwd2 = jax.jit(lambda v: unet_block_forward(v, params, C_out, tile_l=128))
    out2 = jax.block_until_ready(fwd2(x2))
    ref2 = jax.block_until_ready(_reference_forward(x2, torch_params))
    assert out2.shape == (N, C_out, L2)
    err2 = float(jnp.max(jnp.abs(out2 - ref2)))
    assert err2 < 2e-2, f"Pallas kernel mismatch vs reference (tiled): {err2}"

    print("KERNEL_OK")
</pallas_src>

<mosaic_0001>
module attributes {stable_mosaic.version = 11 : i64} {
  func.func @_bn_relu_kernel(%arg0: i32, %arg1: memref<128x128xbf16, #tpu.memory_space<vmem>>, %arg2: memref<1x128xf32, #tpu.memory_space<vmem>>, %arg3: memref<1x128xf32, #tpu.memory_space<vmem>>, %arg4: memref<128x128xbf16, #tpu.memory_space<vmem>>) attributes {dimension_semantics = [#tpu.dimension_semantics<parallel>], iteration_bounds = array<i64: 2>, scalar_prefetch = 0 : i64, scratch_operands = 0 : i64, tpu.core_type = #tpu.core_type<tc>, window_params = [{transform_indices = @transform_0, window_bounds = array<i64: 128, 128>}, {pipeline_mode = #tpu.pipeline_mode<synchronous>, transform_indices = @transform_1, window_bounds = array<i64: 1, 128>}, {pipeline_mode = #tpu.pipeline_mode<synchronous>, transform_indices = @transform_2, window_bounds = array<i64: 1, 128>}, {transform_indices = @transform_3, window_bounds = array<i64: 128, 128>}]} {
    %c0 = arith.constant 0 : index
    %c0_0 = arith.constant 0 : index
    %0 = vector.load %arg1[%c0, %c0_0] : memref<128x128xbf16, #tpu.memory_space<vmem>>, vector<128x128xbf16>
    %1 = arith.extf %0 : vector<128x128xbf16> to vector<128x128xf32>
    %c0_1 = arith.constant 0 : index
    %c0_2 = arith.constant 0 : index
    %2 = vector.load %arg2[%c0_1, %c0_2] : memref<1x128xf32, #tpu.memory_space<vmem>>, vector<1x128xf32>
    %3 = vector.broadcast %2 : vector<1x128xf32> to vector<128x128xf32>
    %4 = arith.mulf %1, %3 : vector<128x128xf32>
    %c0_3 = arith.constant 0 : index
    %c0_4 = arith.constant 0 : index
    %5 = vector.load %arg3[%c0_3, %c0_4] : memref<1x128xf32, #tpu.memory_space<vmem>>, vector<1x128xf32>
    %6 = vector.broadcast %5 : vector<1x128xf32> to vector<128x128xf32>
    %7 = arith.addf %4, %6 : vector<128x128xf32>
    %cst = arith.constant 0.000000e+00 : f32
    %8 = vector.broadcast %cst : f32 to vector<128x128xf32>
    %9 = arith.maximumf %7, %8 : vector<128x128xf32>
    %10 = arith.truncf %9 : vector<128x128xf32> to vector<128x128xbf16>
    %c0_5 = arith.constant 0 : index
    %c0_6 = arith.constant 0 : index
    %11 = vector.load %arg4[%c0_5, %c0_6] : memref<128x128xbf16, #tpu.memory_space<vmem>>, vector<128x128xbf16>
    tpu.vector_store %arg4[%c0_5, %c0_6], %10 {strides = array<i32>} : memref<128x128xbf16, #tpu.memory_space<vmem>>, vector<128x128xbf16>,
    return
  }
  func.func @transform_0(%arg0: i32) -> (i32, i32) {
    %c0_i32 = arith.constant 0 : i32
    %c0_i32_0 = arith.constant 0 : i32
    return %arg0, %c0_i32 : i32, i32
  }
  func.func @transform_1(%arg0: i32) -> (i32, i32) {
    %c0_i32 = arith.constant 0 : i32
    %c0_i32_0 = arith.constant 0 : i32
    %c0_i32_1 = arith.constant 0 : i32
    return %c0_i32, %c0_i32_0 : i32, i32
  }
  func.func @transform_2(%arg0: i32) -> (i32, i32) {
    %c0_i32 = arith.constant 0 : i32
    %c0_i32_0 = arith.constant 0 : i32
    %c0_i32_1 = arith.constant 0 : i32
    return %c0_i32, %c0_i32_0 : i32, i32
  }
  func.func @transform_3(%arg0: i32) -> (i32, i32) {
    %c0_i32 = arith.constant 0 : i32
    %c0_i32_0 = arith.constant 0 : i32
    return %arg0, %c0_i32 : i32, i32
  }
}

module attributes {stable_mosaic.version = 11 : i64} {
  func.func @_conv_stats_kernel(%arg0: i32, %arg1: i32, %arg2: memref<1x128x128xbf16, #tpu.memory_space<vmem>>, %arg3: memref<1x8x128xbf16, #tpu.memory_space<vmem>>, %arg4: memref<384x128xbf16, #tpu.memory_space<vmem>>, %arg5: memref<1x128xf32, #tpu.memory_space<vmem>>, %arg6: memref<1x128x128xbf16, #tpu.memory_space<vmem>>, %arg7: memref<1x1x8x128xf32, #tpu.memory_space<vmem>>) attributes {dimension_semantics = [#tpu.dimension_semantics<parallel>, #tpu.dimension_semantics<parallel>], iteration_bounds = array<i64: 2, 1>, scalar_prefetch = 0 : i64, scratch_operands = 0 : i64, tpu.core_type = #tpu.core_type<tc>, window_params = [{transform_indices = @transform_0, window_bounds = array<i64: 1, 128, 128>}, {transform_indices = @transform_1, window_bounds = array<i64: 1, 8, 128>}, {pipeline_mode = #tpu.pipeline_mode<synchronous>, transform_indices = @transform_2, window_bounds = array<i64: 384, 128>}, {pipeline_mode = #tpu.pipeline_mode<synchronous>, transform_indices = @transform_3, window_bounds = array<i64: 1, 128>}, {transform_indices = @transform_4, window_bounds = array<i64: 1, 128, 128>}, {transform_indices = @transform_5, window_bounds = array<i64: 1, 1, 8, 128>}]} {
    %c0 = arith.constant 0 : index
    %c0_0 = arith.constant 0 : index
    %c0_1 = arith.constant 0 : index
    %0 = vector.load %arg2[%c0, %c0_0, %c0_1] : memref<1x128x128xbf16, #tpu.memory_space<vmem>>, vector<1x128x128xbf16>
    %1 = vector.shape_cast %0 : vector<1x128x128xbf16> to vector<128x128xbf16>
    %c0_2 = arith.constant 0 : index
    %c0_3 = arith.constant 0 : index
    %c0_4 = arith.constant 0 : index
    %2 = vector.load %arg3[%c0_2, %c0_3, %c0_4] : memref<1x8x128xbf16, #tpu.memory_space<vmem>>, vector<1x8x128xbf16>
    %3 = vector.shape_cast %2 : vector<1x8x128xbf16> to vector<8x128xbf16>
    %4 = vector.extract_strided_slice %3 {offsets = [0, 0], sizes = [2, 128], strides = [1, 1]} : vector<8x128xbf16> to vector<2x128xbf16>
    %5 = tpu.concatenate %1, %4 in 0 : vector<128x128xbf16>, vector<2x128xbf16> -> vector<130x128xbf16>
    %cst = arith.constant 0.000000e+00 : f32
    %6 = vector.broadcast %cst : f32 to vector<128x128xf32>
    %7 = vector.extract_strided_slice %5 {offsets = [0, 0], sizes = [128, 128], strides = [1, 1]} : vector<130x128xbf16> to vector<128x128xbf16>
    %c0_5 = arith.constant 0 : index
    %c0_6 = arith.constant 0 : index
    %8 = vector.load %arg4[%c0_5, %c0_6] : memref<384x128xbf16, #tpu.memory_space<vmem>>, vector<128x128xbf16>
    %cst_7 = arith.constant dense<0.000000e+00> : vector<128x128xf32>
    %9 = tpu.matmul %7, %8, %cst_7 {dimension_numbers = #tpu.dot_dimension_numbers<[1], [0], [0], [1], [0, 0, 1, 1], [], []>} : vector<128x128xbf16>, vector<128x128xbf16>, vector<128x128xf32> -> vector<128x128xf32>
    %10 = arith.addf %6, %9 : vector<128x128xf32>
    %11 = vector.extract_strided_slice %5 {offsets = [1, 0], sizes = [128, 128], strides = [1, 1]} : vector<130x128xbf16> to vector<128x128xbf16>
    %c128 = arith.constant 128 : index
    %c0_8 = arith.constant 0 : index
    %12 = vector.load %arg4[%c128, %c0_8] : memref<384x128xbf16, #tpu.memory_space<vmem>>, vector<128x128xbf16>
    %cst_9 = arith.constant dense<0.000000e+00> : vector<128x128xf32>
    %13 = tpu.matmul %11, %12, %cst_9 {dimension_numbers = #tpu.dot_dimension_numbers<[1], [0], [0], [1], [0, 0, 1, 1], [], []>} : vector<128x128xbf16>, vector<128x128xbf16>, vector<128x128xf32> -> vector<128x128xf32>
    %14 = arith.addf %10, %13 : vector<128x128xf32>
    %15 = vector.extract_strided_slice %5 {offsets = [2, 0], sizes = [128, 128], strides = [1, 1]} : vector<130x128xbf16> to vector<128x128xbf16>
    %c256 = arith.constant 256 : index
    %c0_10 = arith.constant 0 : index
    %16 = vector.load %arg4[%c256, %c0_10] : memref<384x128xbf16, #tpu.memory_space<vmem>>, vector<128x128xbf16>
    %cst_11 = arith.constant dense<0.000000e+00> : vector<128x128xf32>
    %17 = tpu.matmul %15, %16, %cst_11 {dimension_numbers = #tpu.dot_dimension_numbers<[1], [0], [0], [1], [0, 0, 1, 1], [], []>} : vector<128x128xbf16>, vector<128x128xbf16>, vector<128x128xf32> -> vector<128x128xf32>
    %18 = arith.addf %14, %17 : vector<128x128xf32>
    %c0_12 = arith.constant 0 : index
    %c0_13 = arith.constant 0 : index
    %19 = vector.load %arg5[%c0_12, %c0_13] : memref<1x128xf32, #tpu.memory_space<vmem>>, vector<1x128xf32>
    %20 = vector.broadcast %19 : vector<1x128xf32> to vector<128x128xf32>
    %21 = arith.addf %18, %20 : vector<128x128xf32>
    %22 = arith.truncf %21 : vector<128x128xf32> to vector<128x128xbf16>
    %c0_14 = arith.constant 0 : index
    %c0_15 = arith.constant 0 : index
    %c0_16 = arith.constant 0 : index
    %23 = vector.load %arg6[%c0_14, %c0_15, %c0_16] : memref<1x128x128xbf16, #tpu.memory_space<vmem>>, vector<1x128x128xbf16>
    %24 = vector.shape_cast %23 : vector<1x128x128xbf16> to vector<128x128xbf16>
    %25 = vector.shape_cast %22 : vector<128x128xbf16> to vector<1x128x128xbf16>
    tpu.vector_store %arg6[%c0_14, %c0_15, %c0_16], %25 {strides = array<i32>} : memref<1x128x128xbf16, #tpu.memory_space<vmem>>, vector<1x128x128xbf16>,
    %c128_i32 = arith.constant 128 : i32
    %26 = arith.muli %arg1, %c128_i32 : i32
    %27 = tpu.iota {dimensions = array<i32: 0>} : vector<128x1xi32>
    %28 = vector.broadcast %26 : i32 to vector<128x1xi32>
    %29 = arith.addi %28, %27 : vector<128x1xi32>
    %c16_i32 = arith.constant 16 : i32
    %30 = vector.broadcast %c16_i32 : i32 to vector<128x1xi32>
    %31 = arith.cmpi slt, %29, %30 : vector<128x1xi32>
    %cst_17 = arith.constant 0.000000e+00 : f32
    %32 = vector.shape_cast %31 : vector<128x1xi1> to vector<128x1xi1>
    %33 = vector.broadcast %32 : vector<128x1xi1> to vector<128x128xi1>
    %34 = vector.broadcast %cst_17 : f32 to vector<128x128xf32>
    %35 = arith.select %33, %21, %34 : vector<128x128xi1>, vector<128x128xf32>
    %cst_18 = arith.constant dense<0.000000e+00> : vector<128xf32>
    %36 = vector.multi_reduction <add>, %35, %cst_18 [0] : vector<128x128xf32> to vector<128xf32>
    %37 = vector.shape_cast %36 : vector<128xf32> to vector<1x128xf32>
    %38 = arith.mulf %35, %35 : vector<128x128xf32>
    %cst_19 = arith.constant dense<0.000000e+00> : vector<128xf32>
    %39 = vector.multi_reduction <add>, %38, %cst_19 [0] : vector<128x128xf32> to vector<128xf32>
    %40 = vector.shape_cast %39 : vector<128xf32> to vector<1x128xf32>
    %cst_20 = arith.constant 0.000000e+00 : f32
    %41 = vector.broadcast %cst_20 : f32 to vector<6x128xf32>
    %42 = tpu.concatenate %37, %40, %41 in 0 : vector<1x128xf32>, vector<1x128xf32>, vector<6x128xf32> -> vector<8x128xf32>
    %c0_21 = arith.constant 0 : index
    %c0_22 = arith.constant 0 : index
    %c0_23 = arith.constant 0 : index
    %c0_24 = arith.constant 0 : index
    %43 = vector.load %arg7[%c0_21, %c0_22, %c0_23, %c0_24] : memref<1x1x8x128xf32, #tpu.memory_space<vmem>>, vector<1x1x8x128xf32>
    %44 = vector.shape_cast %43 : vector<1x1x8x128xf32> to vector<8x128xf32>
    %45 = vector.shape_cast %42 : vector<8x128xf32> to vector<1x1x8x128xf32>
    tpu.vector_store %arg7[%c0_21, %c0_22, %c0_23, %c0_24], %45 {strides = array<i32>} : memref<1x1x8x128xf32, #tpu.memory_space<vmem>>, vector<1x1x8x128xf32>,
    return
  }
  func.func @transform_0(%arg0: i32, %arg1: i32) -> (i32, i32, i32) {
    %c0_i32 = arith.constant 0 : i32
    %c0_i32_0 = arith.constant 0 : i32
    return %arg0, %arg1, %c0_i32 : i32, i32, i32
  }
  func.func @transform_1(%arg0: i32, %arg1: i32) -> (i32, i32, i32) {
    %c1_i32 = arith.constant 1 : i32
    %0 = arith.addi %arg1, %c1_i32 : i32
    %c16_i32 = arith.constant 16 : i32
    %1 = arith.muli %0, %c16_i32 : i32
    %c0_i32 = arith.constant 0 : i32
    %c0_i32_0 = arith.constant 0 : i32
    return %arg0, %1, %c0_i32 : i32, i32, i32
  }
  func.func @transform_2(%arg0: i32, %arg1: i32) -> (i32, i32) {
    %c0_i32 = arith.constant 0 : i32
    %c0_i32_0 = arith.constant 0 : i32
    %c0_i32_1 = arith.constant 0 : i32
    return %c0_i32, %c0_i32_0 : i32, i32
  }
  func.func @transform_3(%arg0: i32, %arg1: i32) -> (i32, i32) {
    %c0_i32 = arith.constant 0 : i32
    %c0_i32_0 = arith.constant 0 : i32
    %c0_i32_1 = arith.constant 0 : i32
    return %c0_i32, %c0_i32_0 : i32, i32
  }
  func.func @transform_4(%arg0: i32, %arg1: i32) -> (i32, i32, i32) {
    %c0_i32 = arith.constant 0 : i32
    %c0_i32_0 = arith.constant 0 : i32
    return %arg0, %arg1, %c0_i32 : i32, i32, i32
  }
  func.func @transform_5(%arg0: i32, %arg1: i32) -> (i32, i32, i32, i32) {
    %c0_i32 = arith.constant 0 : i32
    %c0_i32_0 = arith.constant 0 : i32
    %c0_i32_1 = arith.constant 0 : i32
    return %arg0, %arg1, %c0_i32, %c0_i32_0 : i32, i32, i32, i32
  }
}

module attributes {stable_mosaic.version = 11 : i64} {
  func.func @_conv_stats_kernel(%arg0: i32, %arg1: i32, %arg2: memref<1x128x128xbf16, #tpu.memory_space<vmem>>, %arg3: memref<1x8x128xbf16, #tpu.memory_space<vmem>>, %arg4: memref<384x128xbf16, #tpu.memory_space<vmem>>, %arg5: memref<1x128xf32, #tpu.memory_space<vmem>>, %arg6: memref<1x128x128xbf16, #tpu.memory_space<vmem>>, %arg7: memref<1x1x8x128xf32, #tpu.memory_space<vmem>>) attributes {dimension_semantics = [#tpu.dimension_semantics<parallel>, #tpu.dimension_semantics<parallel>], iteration_bounds = array<i64: 2, 1>, scalar_prefetch = 0 : i64, scratch_operands = 0 : i64, tpu.core_type = #tpu.core_type<tc>, window_params = [{transform_indices = @transform_0, window_bounds = array<i64: 1, 128, 128>}, {transform_indices = @transform_1, window_bounds = array<i64: 1, 8, 128>}, {pipeline_mode = #tpu.pipeline_mode<synchronous>, transform_indices = @transform_2, window_bounds = array<i64: 384, 128>}, {pipeline_mode = #tpu.pipeline_mode<synchronous>, transform_indices = @transform_3, window_bounds = array<i64: 1, 128>}, {transform_indices = @transform_4, window_bounds = array<i64: 1, 128, 128>}, {transform_indices = @transform_5, window_bounds = array<i64: 1, 1, 8, 128>}]} {
    %c0 = arith.constant 0 : index
    %c0_0 = arith.constant 0 : index
    %c0_1 = arith.constant 0 : index
    %0 = vector.load %arg2[%c0, %c0_0, %c0_1] : memref<1x128x128xbf16, #tpu.memory_space<vmem>>, vector<1x128x128xbf16>
    %1 = vector.shape_cast %0 : vector<1x128x128xbf16> to vector<128x128xbf16>
    %c0_2 = arith.constant 0 : index
    %c0_3 = arith.constant 0 : index
    %c0_4 = arith.constant 0 : index
    %2 = vector.load %arg3[%c0_2, %c0_3, %c0_4] : memref<1x8x128xbf16, #tpu.memory_space<vmem>>, vector<1x8x128xbf16>
    %3 = vector.shape_cast %2 : vector<1x8x128xbf16> to vector<8x128xbf16>
    %4 = vector.extract_strided_slice %3 {offsets = [0, 0], sizes = [2, 128], strides = [1, 1]} : vector<8x128xbf16> to vector<2x128xbf16>
    %5 = tpu.concatenate %1, %4 in 0 : vector<128x128xbf16>, vector<2x128xbf16> -> vector<130x128xbf16>
    %cst = arith.constant 0.000000e+00 : f32
    %6 = vector.broadcast %cst : f32 to vector<128x128xf32>
    %7 = vector.extract_strided_slice %5 {offsets = [0, 0], sizes = [128, 128], strides = [1, 1]} : vector<130x128xbf16> to vector<128x128xbf16>
    %c0_5 = arith.constant 0 : index
    %c0_6 = arith.constant 0 : index
    %8 = vector.load %arg4[%c0_5, %c0_6] : memref<384x128xbf16, #tpu.memory_space<vmem>>, vector<128x128xbf16>
    %cst_7 = arith.constant dense<0.000000e+00> : vector<128x128xf32>
    %9 = tpu.matmul %7, %8, %cst_7 {dimension_numbers = #tpu.dot_dimension_numbers<[1], [0], [0], [1], [0, 0, 1, 1], [], []>} : vector<128x128xbf16>, vector<128x128xbf16>, vector<128x128xf32> -> vector<128x128xf32>
    %10 = arith.addf %6, %9 : vector<128x128xf32>
    %11 = vector.extract_strided_slice %5 {offsets = [1, 0], sizes = [128, 128], strides = [1, 1]} : vector<130x128xbf16> to vector<128x128xbf16>
    %c128 = arith.constant 128 : index
    %c0_8 = arith.constant 0 : index
    %12 = vector.load %arg4[%c128, %c0_8] : memref<384x128xbf16, #tpu.memory_space<vmem>>, vector<128x128xbf16>
    %cst_9 = arith.constant dense<0.000000e+00> : vector<128x128xf32>
    %13 = tpu.matmul %11, %12, %cst_9 {dimension_numbers = #tpu.dot_dimension_numbers<[1], [0], [0], [1], [0, 0, 1, 1], [], []>} : vector<128x128xbf16>, vector<128x128xbf16>, vector<128x128xf32> -> vector<128x128xf32>
    %14 = arith.addf %10, %13 : vector<128x128xf32>
    %15 = vector.extract_strided_slice %5 {offsets = [2, 0], sizes = [128, 128], strides = [1, 1]} : vector<130x128xbf16> to vector<128x128xbf16>
    %c256 = arith.constant 256 : index
    %c0_10 = arith.constant 0 : index
    %16 = vector.load %arg4[%c256, %c0_10] : memref<384x128xbf16, #tpu.memory_space<vmem>>, vector<128x128xbf16>
    %cst_11 = arith.constant dense<0.000000e+00> : vector<128x128xf32>
    %17 = tpu.matmul %15, %16, %cst_11 {dimension_numbers = #tpu.dot_dimension_numbers<[1], [0], [0], [1], [0, 0, 1, 1], [], []>} : vector<128x128xbf16>, vector<128x128xbf16>, vector<128x128xf32> -> vector<128x128xf32>
    %18 = arith.addf %14, %17 : vector<128x128xf32>
    %c0_12 = arith.constant 0 : index
    %c0_13 = arith.constant 0 : index
    %19 = vector.load %arg5[%c0_12, %c0_13] : memref<1x128xf32, #tpu.memory_space<vmem>>, vector<1x128xf32>
    %20 = vector.broadcast %19 : vector<1x128xf32> to vector<128x128xf32>
    %21 = arith.addf %18, %20 : vector<128x128xf32>
    %22 = arith.truncf %21 : vector<128x128xf32> to vector<128x128xbf16>
    %c0_14 = arith.constant 0 : index
    %c0_15 = arith.constant 0 : index
    %c0_16 = arith.constant 0 : index
    %23 = vector.load %arg6[%c0_14, %c0_15, %c0_16] : memref<1x128x128xbf16, #tpu.memory_space<vmem>>, vector<1x128x128xbf16>
    %24 = vector.shape_cast %23 : vector<1x128x128xbf16> to vector<128x128xbf16>
    %25 = vector.shape_cast %22 : vector<128x128xbf16> to vector<1x128x128xbf16>
    tpu.vector_store %arg6[%c0_14, %c0_15, %c0_16], %25 {strides = array<i32>} : memref<1x128x128xbf16, #tpu.memory_space<vmem>>, vector<1x128x128xbf16>,
    %c128_i32 = arith.constant 128 : i32
    %26 = arith.muli %arg1, %c128_i32 : i32
    %27 = tpu.iota {dimensions = array<i32: 0>} : vector<128x1xi32>
    %28 = vector.broadcast %26 : i32 to vector<128x1xi32>
    %29 = arith.addi %28, %27 : vector<128x1xi32>
    %c16_i32 = arith.constant 16 : i32
    %30 = vector.broadcast %c16_i32 : i32 to vector<128x1xi32>
    %31 = arith.cmpi slt, %29, %30 : vector<128x1xi32>
    %cst_17 = arith.constant 0.000000e+00 : f32
    %32 = vector.shape_cast %31 : vector<128x1xi1> to vector<128x1xi1>
    %33 = vector.broadcast %32 : vector<128x1xi1> to vector<128x128xi1>
    %34 = vector.broadcast %cst_17 : f32 to vector<128x128xf32>
    %35 = arith.select %33, %21, %34 : vector<128x128xi1>, vector<128x128xf32>
    %cst_18 = arith.constant dense<0.000000e+00> : vector<128xf32>
    %36 = vector.multi_reduction <add>, %35, %cst_18 [0] : vector<128x128xf32> to vector<128xf32>
    %37 = vector.shape_cast %36 : vector<128xf32> to vector<1x128xf32>
    %38 = arith.mulf %35, %35 : vector<128x128xf32>
    %cst_19 = arith.constant dense<0.000000e+00> : vector<128xf32>
    %39 = vector.multi_reduction <add>, %38, %cst_19 [0] : vector<128x128xf32> to vector<128xf32>
    %40 = vector.shape_cast %39 : vector<128xf32> to vector<1x128xf32>
    %cst_20 = arith.constant 0.000000e+00 : f32
    %41 = vector.broadcast %cst_20 : f32 to vector<6x128xf32>
    %42 = tpu.concatenate %37, %40, %41 in 0 : vector<1x128xf32>, vector<1x128xf32>, vector<6x128xf32> -> vector<8x128xf32>
    %c0_21 = arith.constant 0 : index
    %c0_22 = arith.constant 0 : index
    %c0_23 = arith.constant 0 : index
    %c0_24 = arith.constant 0 : index
    %43 = vector.load %arg7[%c0_21, %c0_22, %c0_23, %c0_24] : memref<1x1x8x128xf32, #tpu.memory_space<vmem>>, vector<1x1x8x128xf32>
    %44 = vector.shape_cast %43 : vector<1x1x8x128xf32> to vector<8x128xf32>
    %45 = vector.shape_cast %42 : vector<8x128xf32> to vector<1x1x8x128xf32>
    tpu.vector_store %arg7[%c0_21, %c0_22, %c0_23, %c0_24], %45 {strides = array<i32>} : memref<1x1x8x128xf32, #tpu.memory_space<vmem>>, vector<1x1x8x128xf32>,
    return
  }
  func.func @transform_0(%arg0: i32, %arg1: i32) -> (i32, i32, i32) {
    %c0_i32 = arith.constant 0 : i32
    %c0_i32_0 = arith.constant 0 : i32
    return %arg0, %arg1, %c0_i32 : i32, i32, i32
  }
  func.func @transform_1(%arg0: i32, %arg1: i32) -> (i32, i32, i32) {
    %c1_i32 = arith.constant 1 : i32
    %0 = arith.addi %arg1, %c1_i32 : i32
    %c16_i32 = arith.constant 16 : i32
    %1 = arith.muli %0, %c16_i32 : i32
    %c0_i32 = arith.constant 0 : i32
    %c0_i32_0 = arith.constant 0 : i32
    return %arg0, %1, %c0_i32 : i32, i32, i32
  }
  func.func @transform_2(%arg0: i32, %arg1: i32) -> (i32, i32) {
    %c0_i32 = arith.constant 0 : i32
    %c0_i32_0 = arith.constant 0 : i32
    %c0_i32_1 = arith.constant 0 : i32
    return %c0_i32, %c0_i32_0 : i32, i32
  }
  func.func @transform_3(%arg0: i32, %arg1: i32) -> (i32, i32) {
    %c0_i32 = arith.constant 0 : i32
    %c0_i32_0 = arith.constant 0 : i32
    %c0_i32_1 = arith.constant 0 : i32
    return %c0_i32, %c0_i32_0 : i32, i32
  }
  func.func @transform_4(%arg0: i32, %arg1: i32) -> (i32, i32, i32) {
    %c0_i32 = arith.constant 0 : i32
    %c0_i32_0 = arith.constant 0 : i32
    return %arg0, %arg1, %c0_i32 : i32, i32, i32
  }
  func.func @transform_5(%arg0: i32, %arg1: i32) -> (i32, i32, i32, i32) {
    %c0_i32 = arith.constant 0 : i32
    %c0_i32_0 = arith.constant 0 : i32
    %c0_i32_1 = arith.constant 0 : i32
    return %arg0, %arg1, %c0_i32, %c0_i32_0 : i32, i32, i32, i32
  }
}

</mosaic_0001>

<llo_original>
// kernel: _lambda_.5
$region0: #{_lambda_.5}
  #allocation0 [shape = 'u32[]', space=smem, size = 0x4, offset = 0x4, fixed_abs, tag = 'smem constant byte address 0x4 - core index']
  #allocation1 [shape = 'u32[72,128]{1,0:T(1,128)}', space=vmem, size = 0x9000, scoped, tag = 'internal scratch']
  %s0 = inlined_call_operand.vmem [shape: bf16[256,128], index: 0, kind: input, shape index: {}]
  %s1 = inlined_call_operand.vmem [shape: f32[1,128], index: 1, kind: input, shape index: {}]
  %s2 = inlined_call_operand.vmem [shape: f32[1,128], index: 2, kind: input, shape index: {}]
  %s3 = inlined_call_operand.vmem [shape: bf16[256,128], index: 3, kind: output, shape index: {}]
  %s4 = sld [smem:[#allocation0]]
  $region45: #{_lambda_.5} parent=0
    _
  %s6 = ssub.s32 1, %s4
  %s7 = scalar_select 0, %s6, %s4
  loop: start=0, step=1, limit=4
  $region2: #{_lambda_.5} parent=0 // loop_pre_header
    _
  $region3: #{_lambda_.5} parent=0 // loop_header
    %s9 = sphi 0, %s13
    %p10 = scmp.ge.s32.totalorder %s9, 4
    %s19 = sphi 0, %s21
    %s22 = sphi 0, %s19
    %s23 = sphi 0, %s22
    %s39 = sphi 0, %s23
    %s43 = sphi 0, %s43
    %s45 = sphi 0, %s43
    %s46 = sphi 0, %s45
    %s60 = sphi 0, %s46
    %s64 = sphi 0, %s64
    %s66 = sphi 0, %s64
    %s67 = sphi 0, %s66
    %s81 = sphi 0, %s67
    %s87 = sphi 0, %s89
    %s90 = sphi 0, %s87
    %s91 = sphi 0, %s90
    %s107 = sphi 0, %s91
  $region4: #{_lambda_.5} parent=0 // loop_header_branch
    %12 = sbr.rel (%p10) target = $region8
  $region5: #{_lambda_.5} parent=0 // loop_body
    %s14 = ssub.s32 %s9, 1
    %s15 = ssub.s32 %s9, 2
    %s16 = sadd.s32 %s9, 1
    %s17 = ssub.s32 %s9, %s16
    %p18 = scmp.eq.s32.totalorder %s17, 0
    %s20 = sadd.s32 %s19, 1
    %s21 = scalar_select %p18, %s19, %s20
    %p24 = pneg %p18
    %p25 = scmp.eq.s32.totalorder %s9, 1
    %p26 = por %p24, %p25
    %p27 = scmp.ne.s32.totalorder %s19, %s22
    %p28 = scmp.eq.s32.totalorder %s9, 0
    %p29 = por %p27, %p28
    %p30 = scmp.ne.s32.totalorder %s19, %s22
    %p31 = scmp.eq.s32.totalorder %s14, 1
    %p32 = por %p30, %p31
    %p33 = scmp.ne.s32.totalorder %s22, %s23
    %p34 = scmp.eq.s32.totalorder %s14, 0
    %p35 = por %p33, %p34
    %p36 = scmp.ne.s32.totalorder %s22, %s23
    %p37 = scmp.eq.s32.totalorder %s15, 1
    %p38 = por %p36, %p37
    %p40 = scmp.ne.s32.totalorder %s23, %s39
    %p41 = scmp.eq.s32.totalorder %s15, 0
    %p42 = por %p40, %p41
    %s44 = sadd.s32 %s43, 1
    %p47 = scmp.eq.s32.totalorder %s9, 1
    %p48 = scmp.ne.s32.totalorder %s43, %s45
    %p49 = scmp.eq.s32.totalorder %s9, 0
    %p50 = por %p48, %p49
    %p51 = scmp.ne.s32.totalorder %s43, %s45
    %p52 = scmp.eq.s32.totalorder %s14, 1
    %p53 = por %p51, %p52
    %p54 = scmp.ne.s32.totalorder %s45, %s46
    %p55 = scmp.eq.s32.totalorder %s14, 0
    %p56 = por %p54, %p55
    %p57 = scmp.ne.s32.totalorder %s45, %s46
    %p58 = scmp.eq.s32.totalorder %s15, 1
    %p59 = por %p57, %p58
    %p61 = scmp.ne.s32.totalorder %s46, %s60
    %p62 = scmp.eq.s32.totalorder %s15, 0
    %p63 = por %p61, %p62
    %s65 = sadd.s32 %s64, 1
    %p68 = scmp.eq.s32.totalorder %s9, 1
    %p69 = scmp.ne.s32.totalorder %s64, %s66
    %p70 = scmp.eq.s32.totalorder %s9, 0
    %p71 = por %p69, %p70
    %p72 = scmp.ne.s32.totalorder %s64, %s66
    %p73 = scmp.eq.s32.totalorder %s14, 1
    %p74 = por %p72, %p73
    %p75 = scmp.ne.s32.totalorder %s66, %s67
    %p76 = scmp.eq.s32.totalorder %s14, 0
    %p77 = por %p75, %p76
    %p78 = scmp.ne.s32.totalorder %s66, %s67
    %p79 = scmp.eq.s32.totalorder %s15, 1
    %p80 = por %p78, %p79
    %p82 = scmp.ne.s32.totalorder %s67, %s81
    %p83 = scmp.eq.s32.totalorder %s15, 0
    %p84 = por %p82, %p83
    %s85 = ssub.s32 %s9, %s16
    %p86 = scmp.eq.s32.totalorder %s85, 0
    %s88 = sadd.s32 %s87, 1
    %s89 = scalar_select %p86, %s87, %s88
    %p92 = pneg %p86
    %p93 = scmp.eq.s32.totalorder %s9, 1
    %p94 = por %p92, %p93
    %p95 = scmp.ne.s32.totalorder %s87, %s90
    %p96 = scmp.eq.s32.totalorder %s9, 0
    %p97 = por %p95, %p96
    %p98 = scmp.ne.s32.totalorder %s87, %s90
    %p99 = scmp.eq.s32.totalorder %s14, 1
    %p100 = por %p98, %p99
    %p101 = scmp.ne.s32.totalorder %s90, %s91
    %p102 = scmp.eq.s32.totalorder %s14, 0
    %p103 = por %p101, %p102
    %p104 = scmp.ne.s32.totalorder %s90, %s91
    %p105 = scmp.eq.s32.totalorder %s15, 1
    %p106 = por %p104, %p105
    %p108 = scmp.ne.s32.totalorder %s91, %s107
    %p109 = scmp.eq.s32.totalorder %s15, 0
    %p110 = por %p108, %p109
    %p111 = scmp.le.s32.totalorder 1, %s9
    %p112 = scmp.lt.s32.totalorder %s9, 3
    %p113 = pnand %p111, %p112
    %p114 = pneg %p113
    // Predicated region
    $region9: #{_lambda_.5} parent=5 // pred_check
      _
    $region10: #{_lambda_.5} parent=5 // pred_check_branch
      %116 = sbr.rel (%p113) target = $region12
    $region11: #{_lambda_.5} parent=5 // pred_region
      %s117 = ssub.s32 %s9, 1
      // Predicated region
      $region13: #{_lambda_.5} parent=11 // pred_check
        %p118 = pneg %p56
      $region14: #{_lambda_.5} parent=11 // pred_check_branch
        %120 = sbr.rel (%p118) target = $region16
      $region15: #{_lambda_.5} parent=11 // pred_region
        _
      $region16: #{_lambda_.5} parent=11 // pred_fallthru
        _
      // Predicated region
      $region17: #{_lambda_.5} parent=11 // pred_check
        %p121 = pneg %p77
      $region18: #{_lambda_.5} parent=11 // pred_check_branch
        %123 = sbr.rel (%p121) target = $region20
      $region19: #{_lambda_.5} parent=11 // pred_region
        _
      $region20: #{_lambda_.5} parent=11 // pred_fallthru
        _
    $region12: #{_lambda_.5} parent=5 // pred_fallthru
      _
    %p124 = scmp.lt.s32.totalorder %s9, 2
    // Predicated region
    $region21: #{_lambda_.5} parent=5 // pred_check
      %p125 = pneg %p124
    $region22: #{_lambda_.5} parent=5 // pred_check_branch
      %127 = sbr.rel (%p125) target = $region24
    $region23: #{_lambda_.5} parent=5 // pred_region
      // Predicated region
      $region25: #{_lambda_.5} parent=23 // pred_check
        %p128 = pneg %p29
      $region26: #{_lambda_.5} parent=23 // pred_check_branch
        %130 = sbr.rel (%p128) target = $region28
      $region27: #{_lambda_.5} parent=23 // pred_region
        %s131 = smul.u32 16, %s9
        %p132 = scmp.lt.s32.totalorder %s131, 31
        %s133 = scalar_select %p132, %s131, 31
        %s134 = smul.addr %s133, 4
        %s135 = scalar_lea.vmem %s0, %s134
        %s136 = smul.u32 16, %s9
      $region28: #{_lambda_.5} parent=23 // pred_fallthru
        _
    $region24: #{_lambda_.5} parent=5 // pred_fallthru
      _
    %p137 = scmp.le.s32.totalorder 1, %s9
    %p138 = scmp.lt.s32.totalorder %s9, 3
    %p139 = pnand %p137, %p138
    %p140 = pneg %p139
    // Predicated region
    $region29: #{_lambda_.5} parent=5 // pred_check
      _
    $region30: #{_lambda_.5} parent=5 // pred_check_branch
      %142 = sbr.rel (%p139) target = $region32
    $region31: #{_lambda_.5} parent=5 // pred_region
      %s143 = ssub.s32 %s9, 1
      %s144 = smul.u32 16, %s14
      %p145 = scmp.lt.s32.totalorder %s144, 31
      %s146 = scalar_select %p145, %s144, 31
      %s147 = smul.addr %s146, 4
      %s148 = scalar_lea.vmem %s0, %s147
      %p149 = pneg %p35
      %p150 = pneg %p32
      %p151 = pneg %p56
      %p152 = pneg %p53
      %p153 = pneg %p77
      %p154 = pneg %p74
      %p155 = pneg %p103
      %p156 = pneg %p100
      %s157 = smul.u32 16, %s14
      %p158 = scmp.lt.s32.totalorder %s157, 31
      %s159 = scalar_select %p158, %s157, 31
      %s160 = smul.addr %s159, 4
      %s161 = scalar_lea.vmem %s3, %s160
      %s162 = smul.u32 16, %s14
      %p163 = scmp.lt.s32.totalorder %s162, 31
      %s164 = scalar_select %p163, %s162, 31
      %s165 = smul.addr %s164, 4
      %s166 = scalar_lea.vmem %s0, %s165
      %s167 = smul.u32 16, %s14
      %s168 = smul.u32 16, %s14
      %p169 = scmp.lt.s32.totalorder %s168, 31
      %s170 = scalar_select %p169, %s168, 31
      %s171 = smul.addr %s170, 4
      %s172 = scalar_lea.vmem %s3, %s171
      %s173 = smul.u32 16, %s14
      %v174 = vld [vmem:[%s166] sm:$0xf]
      %v175 = vld [vmem:[%s166 + $0x4] sm:$0xf]
      %v176 = vld [vmem:[%s166 + $0x8] sm:$0xf]
      %v177 = vld [vmem:[%s166 + $0xc] sm:$0xf]
      %v178 = vld [vmem:[%s166 + $0x10] sm:$0xf]
      %v179 = vld [vmem:[%s166 + $0x14] sm:$0xf]
      %v180 = vld [vmem:[%s166 + $0x18] sm:$0xf]
      %v181 = vld [vmem:[%s166 + $0x1c] sm:$0xf]
      %v182 = vld [vmem:[%s166 + $0x20] sm:$0xf]
      %v183 = vld [vmem:[%s166 + $0x24] sm:$0xf]
      %v184 = vld [vmem:[%s166 + $0x28] sm:$0xf]
      %v185 = vld [vmem:[%s166 + $0x2c] sm:$0xf]
      %v186 = vld [vmem:[%s166 + $0x30] sm:$0xf]
      %v187 = vld [vmem:[%s166 + $0x34] sm:$0xf]
      %v188 = vld [vmem:[%s166 + $0x38] sm:$0xf]
      %v189 = vld [vmem:[%s166 + $0x3c] sm:$0xf]
      %v190 = vunpack.c.l.bf16 %v174
      %v191 = vunpack.c.l.bf16 %v175
      %v192 = vunpack.c.l.bf16 %v176
      %v193 = vunpack.c.l.bf16 %v177
      %v194 = vunpack.c.l.bf16 %v178
      %v195 = vunpack.c.l.bf16 %v179
      %v196 = vunpack.c.l.bf16 %v180
      %v197 = vunpack.c.l.bf16 %v181
      %v198 = vunpack.c.l.bf16 %v182
      %v199 = vunpack.c.l.bf16 %v183
      %v200 = vunpack.c.l.bf16 %v184
      %v201 = vunpack.c.l.bf16 %v185
      %v202 = vunpack.c.l.bf16 %v186
      %v203 = vunpack.c.l.bf16 %v187
      %v204 = vunpack.c.l.bf16 %v188
      %v205 = vunpack.c.l.bf16 %v189
      %v206 = vld [vmem:[%s1] sm:$0x1]
      %v208 = vperm.slane %v206, 0
      %v210 = vmul.f32 %v190, %v208
      %v211 = vmul.f32 %v191, %v208
      %v212 = vmul.f32 %v192, %v208
      %v213 = vmul.f32 %v193, %v208
      %v214 = vmul.f32 %v194, %v208
      %v215 = vmul.f32 %v195, %v208
      %v216 = vmul.f32 %v196, %v208
      %v217 = vmul.f32 %v197, %v208
      %v218 = vmul.f32 %v198, %v208
      %v219 = vmul.f32 %v199, %v208
      %v220 = vmul.f32 %v200, %v208
      %v221 = vmul.f32 %v201, %v208
      %v222 = vmul.f32 %v202, %v208
      %v223 = vmul.f32 %v203, %v208
      %v224 = vmul.f32 %v204, %v208
      %v225 = vmul.f32 %v205, %v208
      %v226 = vld [vmem:[%s2] sm:$0x1]
      %v228 = vperm.slane %v226, 0
      %v230 = vadd.f32 %v210, %v228
      %v231 = vadd.f32 %v211, %v228
      %v232 = vadd.f32 %v212, %v228
      %v233 = vadd.f32 %v213, %v228
      %v234 = vadd.f32 %v214, %v228
      %v235 = vadd.f32 %v215, %v228
      %v236 = vadd.f32 %v216, %v228
      %v237 = vadd.f32 %v217, %v228
      %v238 = vadd.f32 %v218, %v228
      %v239 = vadd.f32 %v219, %v228
      %v240 = vadd.f32 %v220, %v228
      %v241 = vadd.f32 %v221, %v228
      %v242 = vadd.f32 %v222, %v228
      %v243 = vadd.f32 %v223, %v228
      %v244 = vadd.f32 %v224, %v228
      %v245 = vadd.f32 %v225, %v228
      %v246 = vmax.f32 %v230, 0.0
      %v247 = vmax.f32 %v231, 0.0
      %v248 = vmax.f32 %v232, 0.0
      %v249 = vmax.f32 %v233, 0.0
      %v250 = vmax.f32 %v234, 0.0
      %v251 = vmax.f32 %v235, 0.0
      %v252 = vmax.f32 %v236, 0.0
      %v253 = vmax.f32 %v237, 0.0
      %v254 = vmax.f32 %v238, 0.0
      %v255 = vmax.f32 %v239, 0.0
      %v256 = vmax.f32 %v240, 0.0
      %v257 = vmax.f32 %v241, 0.0
      %v258 = vmax.f32 %v242, 0.0
      %v259 = vmax.f32 %v243, 0.0
      %v260 = vmax.f32 %v244, 0.0
      %v261 = vmax.f32 %v245, 0.0
      %v262 = vpack.c.bf16 %v246, %v246
      %v263 = vpack.c.bf16 %v247, %v247
      %v264 = vpack.c.bf16 %v248, %v248
      %v265 = vpack.c.bf16 %v249, %v249
      %v266 = vpack.c.bf16 %v250, %v250
      %v267 = vpack.c.bf16 %v251, %v251
      %v268 = vpack.c.bf16 %v252, %v252
      %v269 = vpack.c.bf16 %v253, %v253
      %v270 = vpack.c.bf16 %v254, %v254
      %v271 = vpack.c.bf16 %v255, %v255
      %v272 = vpack.c.bf16 %v256, %v256
      %v273 = vpack.c.bf16 %v257, %v257
      %v274 = vpack.c.bf16 %v258, %v258
      %v275 = vpack.c.bf16 %v259, %v259
      %v276 = vpack.c.bf16 %v260, %v260
      %v277 = vpack.c.bf16 %v261, %v261
      %278 = vst [vmem:[%s172] sm:$0xf] %v262
      %279 = vst [vmem:[%s172 + $0x4] sm:$0xf] %v263
      %280 = vst [vmem:[%s172 + $0x8] sm:$0xf] %v264
      %281 = vst [vmem:[%s172 + $0xc] sm:$0xf] %v265
      %282 = vst [vmem:[%s172 + $0x10] sm:$0xf] %v266
      %283 = vst [vmem:[%s172 + $0x14] sm:$0xf] %v267
      %284 = vst [vmem:[%s172 + $0x18] sm:$0xf] %v268
      %285 = vst [vmem:[%s172 + $0x1c] sm:$0xf] %v269
      %286 = vst [vmem:[%s172 + $0x20] sm:$0xf] %v270
      %287 = vst [vmem:[%s172 + $0x24] sm:$0xf] %v271
      %288 = vst [vmem:[%s172 + $0x28] sm:$0xf] %v272
      %289 = vst [vmem:[%s172 + $0x2c] sm:$0xf] %v273
      %290 = vst [vmem:[%s172 + $0x30] sm:$0xf] %v274
      %291 = vst [vmem:[%s172 + $0x34] sm:$0xf] %v275
      %292 = vst [vmem:[%s172 + $0x38] sm:$0xf] %v276
      %293 = vst [vmem:[%s172 + $0x3c] sm:$0xf] %v277
      %s294 = smul.u32 16, %s14
      %p295 = scmp.lt.s32.totalorder %s294, 31
      %s296 = scalar_select %p295, %s294, 31
      %s297 = smul.addr %s296, 4
      %s298 = scalar_lea.vmem %s3, %s297
      // Predicated region
      $region33: #{_lambda_.5} parent=31 // pred_check
        %p299 = pneg %p100
      $region34: #{_lambda_.5} parent=31 // pred_check_branch
        %301 = sbr.rel (%p299) target = $region36
      $region35: #{_lambda_.5} parent=31 // pred_region
        %s302 = smul.u32 16, %s14
      $region36: #{_lambda_.5} parent=31 // pred_fallthru
        _
    $region32: #{_lambda_.5} parent=5 // pred_fallthru
      _
    %p303 = scmp.le.s32.totalorder 2, %s9
    // Predicated region
    $region37: #{_lambda_.5} parent=5 // pred_check
      %p304 = pneg %p303
    $region38: #{_lambda_.5} parent=5 // pred_check_branch
      %306 = sbr.rel (%p304) target = $region40
    $region39: #{_lambda_.5} parent=5 // pred_region
      %s307 = ssub.s32 %s9, 2
      // Predicated region
      $region41: #{_lambda_.5} parent=39 // pred_check
        %p308 = pneg %p106
      $region42: #{_lambda_.5} parent=39 // pred_check_branch
        %310 = sbr.rel (%p308) target = $region44
      $region43: #{_lambda_.5} parent=39 // pred_region
        %s311 = smul.u32 16, %s15
        %p312 = scmp.lt.s32.totalorder %s311, 31
        %s313 = scalar_select %p312, %s311, 31
        %s314 = smul.addr %s313, 4
        %s315 = scalar_lea.vmem %s3, %s314
      $region44: #{_lambda_.5} parent=39 // pred_fallthru
        _
    $region40: #{_lambda_.5} parent=5 // pred_fallthru
      _
  $region6: #{_lambda_.5} parent=0 // loop_footer
    %s13 = sadd.s32 1, %s9
  $region7: #{_lambda_.5} parent=0 // loop_footer_branch
    %8 = sbr.rel target = $region3
  $region8: #{_lambda_.5} parent=0 // loop_exit
    _

// kernel: _lambda_.4
$region0: #{_lambda_.4}
  #allocation0 [shape = 'u32[]', space=smem, size = 0x4, offset = 0x4, fixed_abs, tag = 'smem constant byte address 0x4 - core index']
  #allocation1 [shape = 'u32[72,128]{1,0:T(1,128)}', space=vmem, size = 0x9000, scoped, tag = 'internal scratch']
  %s0 = inlined_call_operand.vmem [shape: bf16[2,136,128], index: 0, kind: input, shape index: {}, may-alias: {0,1}]
  %s1 = inlined_call_operand.vmem [shape: bf16[2,136,128], index: 1, kind: input, shape index: {}, may-alias: {0,1}]
  %s2 = inlined_call_operand.hbm [shape: bf16[384,128], index: 2, kind: input, shape index: {}]
  %s3 = inlined_call_operand.vmem [shape: f32[1,128], index: 3, kind: input, shape index: {}]
  %s4 = inlined_call_operand.vmem [shape: bf16[2,128,128], index: 4, kind: output, shape index: {0}]
  %s5 = inlined_call_operand.vmem [shape: f32[2,1,8,128], index: 5, kind: output, shape index: {1}]
  %6 = xla_tuple %s4, %s5
  %s7 = sld [smem:[#allocation0]]
  $region61: #{_lambda_.4} parent=0
    _
  %s9 = ssub.s32 1, %s7
  %s10 = scalar_select 0, %s9, %s7
  $region1: #{_lambda_.4} parent=0
    #allocation2 [shape = 'u8[98304]{0}', space=vmem, size = 0x18000, scoped, tag = 'input window, operand 2, single buffered']
    #allocation3 [shape = 's32[2]{0}', space=sflag, size = 0x8, scoped, tag = 'scoped memory for _lambda_.4']
    %11 = vsyncpa [#allocation3], 0
    loop: start=0, step=1, limit=4
    $region2: #{_lambda_.4} parent=1 // loop_pre_header
      _
    $region3: #{_lambda_.4} parent=1 // loop_header
      %s13 = sphi 0, %s17
      %p14 = scmp.ge.s32.totalorder %s13, 4
      %s20 = sphi 0, %s32
      %s21 = sphi 0, %s28
      %s22 = sphi 0, %s20
      %s23 = sphi 0, %s21
      %s24 = sphi 0, %s22
      %s25 = sphi 0, %s23
      %s37 = sphi 0, %s39
      %s40 = sphi 0, %s37
      %s41 = sphi 0, %s40
      %s57 = sphi 0, %s41
      %s69 = sphi 0, %s71
      %s72 = sphi 0, %s69
      %s73 = sphi 0, %s72
      %s89 = sphi 0, %s73
      %s93 = sphi 0, %s93
      %s95 = sphi 0, %s93
      %s96 = sphi 0, %s95
      %s110 = sphi 0, %s96
      %s114 = sphi 0, %s114
      %s116 = sphi 0, %s114
      %s117 = sphi 0, %s116
      %s131 = sphi 0, %s117
      %s139 = sphi 0, %s141
      %s142 = sphi 0, %s139
      %s143 = sphi 0, %s142
      %s159 = sphi 0, %s143
      %s167 = sphi 0, %s169
      %s170 = sphi 0, %s167
      %s171 = sphi 0, %s170
      %s187 = sphi 0, %s171
    $region4: #{_lambda_.4} parent=1 // loop_header_branch
      %16 = sbr.rel (%p14) target = $region8
    $region5: #{_lambda_.4} parent=1 // loop_body
      %s18 = ssub.s32 %s13, 1
      %s19 = ssub.s32 %s13, 2
      %s26 = sadd.s32 1, %s21
      %p27 = scmp.ge.s32.totalorder %s26, 1
      %s28 = scalar_select %p27, 0, %s26
      %s29 = sadd.s32 1, %s20
      %s30 = scalar_select %p27, %s29, %s20
      %p31 = scmp.ge.s32.totalorder %s30, 2
      %s32 = scalar_select %p31, 0, %s30
      %s33 = ssub.s32 %s20, %s32
      %s34 = ssub.s32 %s21, %s28
      %s35 = sor.u32 %s33, %s34
      %p36 = scmp.eq.s32.totalorder %s35, 0
      %s38 = sadd.s32 %s37, 1
      %s39 = scalar_select %p36, %s37, %s38
      %p42 = pneg %p36
      %p43 = scmp.eq.s32.totalorder %s13, 1
      %p44 = por %p42, %p43
      %p45 = scmp.ne.s32.totalorder %s37, %s40
      %p46 = scmp.eq.s32.totalorder %s13, 0
      %p47 = por %p45, %p46
      %p48 = scmp.ne.s32.totalorder %s37, %s40
      %p49 = scmp.eq.s32.totalorder %s18, 1
      %p50 = por %p48, %p49
      %p51 = scmp.ne.s32.totalorder %s40, %s41
      %p52 = scmp.eq.s32.totalorder %s18, 0
      %p53 = por %p51, %p52
      %p54 = scmp.ne.s32.totalorder %s40, %s41
      %p55 = scmp.eq.s32.totalorder %s19, 1
      %p56 = por %p54, %p55
      %p58 = scmp.ne.s32.totalorder %s41, %s57
      %p59 = scmp.eq.s32.totalorder %s19, 0
      %p60 = por %p58, %p59
      %s61 = sadd.s32 %s21, 1
      %s62 = smul.u32 %s61, 16
      %s63 = sadd.s32 %s28, 1
      %s64 = smul.u32 %s63, 16
      %s65 = ssub.s32 %s20, %s32
      %s66 = ssub.s32 %s62, %s64
      %s67 = sor.u32 %s65, %s66
      %p68 = scmp.eq.s32.totalorder %s67, 0
      %s70 = sadd.s32 %s69, 1
      %s71 = scalar_select %p68, %s69, %s70
      %p74 = pneg %p68
      %p75 = scmp.eq.s32.totalorder %s13, 1
      %p76 = por %p74, %p75
      %p77 = scmp.ne.s32.totalorder %s69, %s72
      %p78 = scmp.eq.s32.totalorder %s13, 0
      %p79 = por %p77, %p78
      %p80 = scmp.ne.s32.totalorder %s69, %s72
      %p81 = scmp.eq.s32.totalorder %s18, 1
      %p82 = por %p80, %p81
      %p83 = scmp.ne.s32.totalorder %s72, %s73
      %p84 = scmp.eq.s32.totalorder %s18, 0
      %p85 = por %p83, %p84
      %p86 = scmp.ne.s32.totalorder %s72, %s73
      %p87 = scmp.eq.s32.totalorder %s19, 1
      %p88 = por %p86, %p87
      %p90 = scmp.ne.s32.totalorder %s73, %s89
      %p91 = scmp.eq.s32.totalorder %s19, 0
      %p92 = por %p90, %p91
      %s94 = sadd.s32 %s93, 1
      %p97 = scmp.eq.s32.totalorder %s13, 1
      %p98 = scmp.ne.s32.totalorder %s93, %s95
      %p99 = scmp.eq.s32.totalorder %s13, 0
      %p100 = por %p98, %p99
      %p101 = scmp.ne.s32.totalorder %s93, %s95
      %p102 = scmp.eq.s32.totalorder %s18, 1
      %p103 = por %p101, %p102
      %p104 = scmp.ne.s32.totalorder %s95, %s96
      %p105 = scmp.eq.s32.totalorder %s18, 0
      %p106 = por %p104, %p105
      %p107 = scmp.ne.s32.totalorder %s95, %s96
      %p108 = scmp.eq.s32.totalorder %s19, 1
      %p109 = por %p107, %p108
      %p111 = scmp.ne.s32.totalorder %s96, %s110
      %p112 = scmp.eq.s32.totalorder %s19, 0
      %p113 = por %p111, %p112
      %s115 = sadd.s32 %s114, 1
      %p118 = scmp.eq.s32.totalorder %s13, 1
      %p119 = scmp.ne.s32.totalorder %s114, %s116
      %p120 = scmp.eq.s32.totalorder %s13, 0
      %p121 = por %p119, %p120
      %p122 = scmp.ne.s32.totalorder %s114, %s116
      %p123 = scmp.eq.s32.totalorder %s18, 1
      %p124 = por %p122, %p123
      %p125 = scmp.ne.s32.totalorder %s116, %s117
      %p126 = scmp.eq.s32.totalorder %s18, 0
      %p127 = por %p125, %p126
      %p128 = scmp.ne.s32.totalorder %s116, %s117
      %p129 = scmp.eq.s32.totalorder %s19, 1
      %p130 = por %p128, %p129
      %p132 = scmp.ne.s32.totalorder %s117, %s131
      %p133 = scmp.eq.s32.totalorder %s19, 0
      %p134 = por %p132, %p133
      %s135 = ssub.s32 %s20, %s32
      %s136 = ssub.s32 %s21, %s28
      %s137 = sor.u32 %s135, %s136
      %p138 = scmp.eq.s32.totalorder %s137, 0
      %s140 = sadd.s32 %s139, 1
      %s141 = scalar_select %p138, %s139, %s140
      %p144 = pneg %p138
      %p145 = scmp.eq.s32.totalorder %s13, 1
      %p146 = por %p144, %p145
      %p147 = scmp.ne.s32.totalorder %s139, %s142
      %p148 = scmp.eq.s32.totalorder %s13, 0
      %p149 = por %p147, %p148
      %p150 = scmp.ne.s32.totalorder %s139, %s142
      %p151 = scmp.eq.s32.totalorder %s18, 1
      %p152 = por %p150, %p151
      %p153 = scmp.ne.s32.totalorder %s142, %s143
      %p154 = scmp.eq.s32.totalorder %s18, 0
      %p155 = por %p153, %p154
      %p156 = scmp.ne.s32.totalorder %s142, %s143
      %p157 = scmp.eq.s32.totalorder %s19, 1
      %p158 = por %p156, %p157
      %p160 = scmp.ne.s32.totalorder %s143, %s159
      %p161 = scmp.eq.s32.totalorder %s19, 0
      %p162 = por %p160, %p161
      %s163 = ssub.s32 %s20, %s32
      %s164 = ssub.s32 %s21, %s28
      %s165 = sor.u32 %s163, %s164
      %p166 = scmp.eq.s32.totalorder %s165, 0
      %s168 = sadd.s32 %s167, 1
      %s169 = scalar_select %p166, %s167, %s168
      %p172 = pneg %p166
      %p173 = scmp.eq.s32.totalorder %s13, 1
      %p174 = por %p172, %p173
      %p175 = scmp.ne.s32.totalorder %s167, %s170
      %p176 = scmp.eq.s32.totalorder %s13, 0
      %p177 = por %p175, %p176
      %p178 = scmp.ne.s32.totalorder %s167, %s170
      %p179 = scmp.eq.s32.totalorder %s18, 1
      %p180 = por %p178, %p179
      %p181 = scmp.ne.s32.totalorder %s170, %s171
      %p182 = scmp.eq.s32.totalorder %s18, 0
      %p183 = por %p181, %p182
      %p184 = scmp.ne.s32.totalorder %s170, %s171
      %p185 = scmp.eq.s32.totalorder %s19, 1
      %p186 = por %p184, %p185
      %p188 = scmp.ne.s32.totalorder %s171, %s187
      %p189 = scmp.eq.s32.totalorder %s19, 0
      %p190 = por %p188, %p189
      %p191 = scmp.le.s32.totalorder 1, %s13
      %p192 = scmp.lt.s32.totalorder %s13, 3
      %p193 = pnand %p191, %p192
      %p194 = pneg %p193
      // Predicated region
      $region9: #{_lambda_.4} parent=5 // pred_check
        _
      $region10: #{_lambda_.4} parent=5 // pred_check_branch
        %196 = sbr.rel (%p193) target = $region12
      $region11: #{_lambda_.4} parent=5 // pred_region
        %s197 = ssub.s32 %s13, 1
        // Predicated region
        $region13: #{_lambda_.4} parent=11 // pred_check
          %p198 = pneg %p106
        $region14: #{_lambda_.4} parent=11 // pred_check_branch
          %200 = sbr.rel (%p198) target = $region16
        $region15: #{_lambda_.4} parent=11 // pred_region
          %202 = vsyncadd [#allocation3], 0
          %s203 = sshll.u32 %s2, 4
          %s204 = int_to_ptr.hbm [resolvable:$true] %s203
          %s205 = sshll.u32 [#allocation2], 4
          %s206 = int_to_ptr.vmem [resolvable:$true] %s205
          %211 = dma.hbm_to_vmem [thread:$0]  %s204, 3072, %s206, [#allocation3], 64, 64, 4
        $region16: #{_lambda_.4} parent=11 // pred_fallthru
          _
        // Predicated region
        $region17: #{_lambda_.4} parent=11 // pred_check
          %p212 = pneg %p127
        $region18: #{_lambda_.4} parent=11 // pred_check_branch
          %214 = sbr.rel (%p212) target = $region20
        $region19: #{_lambda_.4} parent=11 // pred_region
          _
        $region20: #{_lambda_.4} parent=11 // pred_fallthru
          _
      $region12: #{_lambda_.4} parent=5 // pred_fallthru
        _
      %p215 = scmp.lt.s32.totalorder %s13, 2
      // Predicated region
      $region21: #{_lambda_.4} parent=5 // pred_check
        %p216 = pneg %p215
      $region22: #{_lambda_.4} parent=5 // pred_check_branch
        %218 = sbr.rel (%p216) target = $region24
      $region23: #{_lambda_.4} parent=5 // pred_region
        // Predicated region
        $region25: #{_lambda_.4} parent=23 // pred_check
          %p219 = pneg %p47
        $region26: #{_lambda_.4} parent=23 // pred_check_branch
          %221 = sbr.rel (%p219) target = $region28
        $region27: #{_lambda_.4} parent=23 // pred_region
          %s222 = smul.u32 16, %s21
          %s223 = ssub.s32 17, %s222
          %p224 = scmp.lt.s32.totalorder %s223, 16
          %s225 = scalar_select %p224, %s223, 16
          %s226 = smul.u32 4, %s225
          %p227 = scmp.lt.s32.totalorder %s20, 1
          %s228 = scalar_select %p227, %s20, 1
          %p229 = scmp.lt.s32.totalorder %s222, 16
          %s230 = scalar_select %p229, %s222, 16
          %s231 = smul.addr %s228, 17
          %s232 = sadd.s32 %s230, %s231
          %s233 = smul.addr %s232, 4
          %s234 = scalar_lea.vmem %s0, %s233
          %s235 = smul.u32 16, %s21
          %s236 = ssub.s32 17, %s235
          %p237 = scmp.lt.s32.totalorder %s236, 16
          %s238 = scalar_select %p237, %s236, 16
          %s239 = smul.u32 4, %s238
        $region28: #{_lambda_.4} parent=23 // pred_fallthru
          _
        // Predicated region
        $region29: #{_lambda_.4} parent=23 // pred_check
          %p240 = pneg %p79
        $region30: #{_lambda_.4} parent=23 // pred_check_branch
          %242 = sbr.rel (%p240) target = $region32
        $region31: #{_lambda_.4} parent=23 // pred_region
          %s243 = sadd.s32 %s21, 1
          %s244 = smul.u32 %s243, 16
          %p245 = scmp.lt.s32.totalorder %s20, 1
          %s246 = scalar_select %p245, %s20, 1
          %p247 = scmp.lt.s32.totalorder %s244, 16
          %s248 = scalar_select %p247, %s244, 16
          %s249 = smul.addr %s246, 17
          %s250 = sadd.s32 %s248, %s249
          %s251 = smul.addr %s250, 4
          %s252 = scalar_lea.vmem %s1, %s251
          %s253 = sadd.s32 %s21, 1
          %s254 = smul.u32 %s253, 16
        $region32: #{_lambda_.4} parent=23 // pred_fallthru
          _
      $region24: #{_lambda_.4} parent=5 // pred_fallthru
        _
      %p255 = scmp.le.s32.totalorder 1, %s13
      %p256 = scmp.lt.s32.totalorder %s13, 3
      %p257 = pnand %p255, %p256
      %p258 = pneg %p257
      // Predicated region
      $region33: #{_lambda_.4} parent=5 // pred_check
        _
      $region34: #{_lambda_.4} parent=5 // pred_check_branch
        %260 = sbr.rel (%p257) target = $region36
      $region35: #{_lambda_.4} parent=5 // pred_region
        %s261 = ssub.s32 %s13, 1
        // Predicated region
        $region37: #{_lambda_.4} parent=35 // pred_check
          %p262 = pneg %p106
        $region38: #{_lambda_.4} parent=35 // pred_check_branch
          %264 = sbr.rel (%p262) target = $region40
        $region39: #{_lambda_.4} parent=35 // pred_region
          %266 = dma.done [#allocation3], 3072
        $region40: #{_lambda_.4} parent=35 // pred_fallthru
          _
        %s267 = smul.u32 16, %s23
        %s268 = ssub.s32 17, %s267
        %p269 = scmp.lt.s32.totalorder %s268, 16
        %s270 = scalar_select %p269, %s268, 16
        %s271 = smul.u32 4, %s270
        %p272 = scmp.lt.s32.totalorder %s22, 1
        %s273 = scalar_select %p272, %s22, 1
        %p274 = scmp.lt.s32.totalorder %s267, 16
        %s275 = scalar_select %p274, %s267, 16
        %s276 = smul.addr %s273, 17
        %s277 = sadd.s32 %s275, %s276
        %s278 = smul.addr %s277, 4
        %s279 = scalar_lea.vmem %s0, %s278
        %p280 = pneg %p53
        %p281 = pneg %p50
        %s282 = sadd.s32 %s23, 1
        %s283 = smul.u32 %s282, 16
        %p284 = scmp.lt.s32.totalorder %s22, 1
        %s285 = scalar_select %p284, %s22, 1
        %p286 = scmp.lt.s32.totalorder %s283, 16
        %s287 = scalar_select %p286, %s283, 16
        %s288 = smul.addr %s285, 17
        %s289 = sadd.s32 %s287, %s288
        %s290 = smul.addr %s289, 4
        %s291 = scalar_lea.vmem %s1, %s290
        %p292 = pneg %p85
        %p293 = pneg %p82
        %p294 = pneg %p106
        %p295 = pneg %p103
        %p296 = pneg %p127
        %p297 = pneg %p124
        %p298 = pneg %p155
        %p299 = pneg %p152
        %s300 = smul.u32 16, %s23
        %p301 = scmp.lt.s32.totalorder %s22, 1
        %s302 = scalar_select %p301, %s22, 1
        %p303 = scmp.lt.s32.totalorder %s300, 15
        %s304 = scalar_select %p303, %s300, 15
        %s305 = smul.addr %s302, 16
        %s306 = sadd.s32 %s304, %s305
        %s307 = smul.addr %s306, 4
        %s308 = scalar_lea.vmem %s4, %s307
        %p309 = pneg %p183
        %p310 = pneg %p180
        %p311 = scmp.lt.s32.totalorder %s22, 1
        %s312 = scalar_select %p311, %s22, 1
        %p313 = scmp.lt.s32.totalorder %s23, 0
        %s314 = scalar_select %p313, %s23, 0
        %s315 = sadd.s32 %s314, %s312
        %s316 = smul.addr %s315, 8
        %s317 = scalar_lea.vmem %s5, %s316
        %s318 = smul.u32 16, %s23
        %s319 = ssub.s32 17, %s318
        %p320 = scmp.lt.s32.totalorder %s319, 16
        %s321 = scalar_select %p320, %s319, 16
        %s322 = smul.u32 4, %s321
        %p323 = scmp.lt.s32.totalorder %s22, 1
        %s324 = scalar_select %p323, %s22, 1
        %p325 = scmp.lt.s32.totalorder %s318, 16
        %s326 = scalar_select %p325, %s318, 16
        %s327 = smul.addr %s324, 17
        %s328 = sadd.s32 %s326, %s327
        %s329 = smul.addr %s328, 4
        %s330 = scalar_lea.vmem %s0, %s329
        %s331 = smul.u32 16, %s23
        %s332 = ssub.s32 17, %s331
        %p333 = scmp.lt.s32.totalorder %s332, 16
        %s334 = scalar_select %p333, %s332, 16
        %s335 = smul.u32 4, %s334
        %s336 = sadd.s32 %s23, 1
        %s337 = smul.u32 %s336, 16
        %p338 = scmp.lt.s32.totalorder %s22, 1
        %s339 = scalar_select %p338, %s22, 1
        %p340 = scmp.lt.s32.totalorder %s337, 16
        %s341 = scalar_select %p340, %s337, 16
        %s342 = smul.addr %s339, 17
        %s343 = sadd.s32 %s341, %s342
        %s344 = smul.addr %s343, 4
        %s345 = scalar_lea.vmem %s1, %s344
        %s346 = sadd.s32 %s23, 1
        %s347 = smul.u32 %s346, 16
        %s348 = smul.u32 16, %s23
        %p349 = scmp.lt.s32.totalorder %s22, 1
        %s350 = scalar_select %p349, %s22, 1
        %p351 = scmp.lt.s32.totalorder %s348, 15
        %s352 = scalar_select %p351, %s348, 15
        %s353 = smul.addr %s350, 16
        %s354 = sadd.s32 %s352, %s353
        %s355 = smul.addr %s354, 4
        %s356 = scalar_lea.vmem %s4, %s355
        %s357 = smul.u32 16, %s23
        %p358 = scmp.lt.s32.totalorder %s22, 1
        %s359 = scalar_select %p358, %s22, 1
        %p360 = scmp.lt.s32.totalorder %s23, 0
        %s361 = scalar_select %p360, %s23, 0
        %s362 = sadd.s32 %s361, %s359
        %s363 = smul.addr %s362, 8
        %s364 = scalar_lea.vmem %s5, %s363
        %v365 = vld [vmem:[%s330] sm:$0xf]
        %v366 = vld [vmem:[%s330 + $0x4] sm:$0xf]
        %v367 = vld [vmem:[%s330 + $0x8] sm:$0xf]
        %v368 = vld [vmem:[%s330 + $0xc] sm:$0xf]
        %v369 = vld [vmem:[%s330 + $0x10] sm:$0xf]
        %v370 = vld [vmem:[%s330 + $0x14] sm:$0xf]
        %v371 = vld [vmem:[%s330 + $0x18] sm:$0xf]
        %v372 = vld [vmem:[%s330 + $0x1c] sm:$0xf]
        %v373 = vld [vmem:[%s330 + $0x20] sm:$0xf]
        %v374 = vld [vmem:[%s330 + $0x24] sm:$0xf]
        %v375 = vld [vmem:[%s330 + $0x28] sm:$0xf]
        %v376 = vld [vmem:[%s330 + $0x2c] sm:$0xf]
        %v377 = vld [vmem:[%s330 + $0x30] sm:$0xf]
        %v378 = vld [vmem:[%s330 + $0x34] sm:$0xf]
        %v379 = vld [vmem:[%s330 + $0x38] sm:$0xf]
        %v380 = vld [vmem:[%s330 + $0x3c] sm:$0xf]
        %v381 = vld [vmem:[%s345] sm:$0xf]
        %v398 = vunpack.c.l.b16 %v365
        %v399 = vunpack.c.l.b16 %v366
        %v400 = vunpack.c.l.b16 %v367
        %v401 = vunpack.c.l.b16 %v368
        %v402 = vunpack.c.l.b16 %v369
        %v403 = vunpack.c.l.b16 %v370
        %v404 = vunpack.c.l.b16 %v371
        %v405 = vunpack.c.l.b16 %v372
        %v406 = vunpack.c.l.b16 %v373
        %v407 = vunpack.c.l.b16 %v374
        %v408 = vunpack.c.l.b16 %v375
        %v409 = vunpack.c.l.b16 %v376
        %v410 = vunpack.c.l.b16 %v377
        %v411 = vunpack.c.l.b16 %v378
        %v412 = vunpack.c.l.b16 %v379
        %v413 = vunpack.c.l.b16 %v380
        %v414 = vpack.c.b16 %v399, %v398
        %v415 = vpack.c.b16 %v401, %v400
        %v416 = vpack.c.b16 %v403, %v402
        %v417 = vpack.c.b16 %v405, %v404
        %v418 = vpack.c.b16 %v407, %v406
        %v419 = vpack.c.b16 %v409, %v408
        %v420 = vpack.c.b16 %v411, %v410
        %v421 = vpack.c.b16 %v413, %v412
        %v430 = vld [vmem:[#allocation2] sm:$0xf]
        %v431 = vld [vmem:[#allocation2 + $0x4] sm:$0xf]
        %v432 = vld [vmem:[#allocation2 + $0x8] sm:$0xf]
        %v433 = vld [vmem:[#allocation2 + $0xc] sm:$0xf]
        %v434 = vld [vmem:[#allocation2 + $0x10] sm:$0xf]
        %v435 = vld [vmem:[#allocation2 + $0x14] sm:$0xf]
        %v436 = vld [vmem:[#allocation2 + $0x18] sm:$0xf]
        %v437 = vld [vmem:[#allocation2 + $0x1c] sm:$0xf]
        %v438 = vld [vmem:[#allocation2 + $0x20] sm:$0xf]
        %v439 = vld [vmem:[#allocation2 + $0x24] sm:$0xf]
        %v440 = vld [vmem:[#allocation2 + $0x28] sm:$0xf]
        %v441 = vld [vmem:[#allocation2 + $0x2c] sm:$0xf]
        %v442 = vld [vmem:[#allocation2 + $0x30] sm:$0xf]
        %v443 = vld [vmem:[#allocation2 + $0x34] sm:$0xf]
        %v444 = vld [vmem:[#allocation2 + $0x38] sm:$0xf]
        %v445 = vld [vmem:[#allocation2 + $0x3c] sm:$0xf]
        %v446 = vld [vmem:[#allocation2 + $0x40] sm:$0xf]
        %v447 = vld [vmem:[#allocation2 + $0x44] sm:$0xf]
        %v448 = vld [vmem:[#allocation2 + $0x48] sm:$0xf]
        %v449 = vld [vmem:[#allocation2 + $0x4c] sm:$0xf]
        %v450 = vld [vmem:[#allocation2 + $0x50] sm:$0xf]
        %v451 = vld [vmem:[#allocation2 + $0x54] sm:$0xf]
        %v452 = vld [vmem:[#allocation2 + $0x58] sm:$0xf]
        %v453 = vld [vmem:[#allocation2 + $0x5c] sm:$0xf]
        %v454 = vld [vmem:[#allocation2 + $0x60] sm:$0xf]
        %v455 = vld [vmem:[#allocation2 + $0x64] sm:$0xf]
        %v456 = vld [vmem:[#allocation2 + $0x68] sm:$0xf]
        %v457 = vld [vmem:[#allocation2 + $0x6c] sm:$0xf]
        %v458 = vld [vmem:[#allocation2 + $0x70] sm:$0xf]
        %v459 = vld [vmem:[#allocation2 + $0x74] sm:$0xf]
        %v460 = vld [vmem:[#allocation2 + $0x78] sm:$0xf]
        %v461 = vld [vmem:[#allocation2 + $0x7c] sm:$0xf]
        %vm462 = vsmask.f32 7424
        %v464 = vshrl.u32 %v414, 16
        %v466 = vshll.u32 %v414, 16
        %v468 = vrot.slane %v466, 1
        %v469 = vor.u32 %v464, %v468
        %v471 = vshll.u32 %v415, 16
        %v473 = vrot.slane %v471, 1
        %v474 = vsel %vm462, %v469, %v473
        %v475 = vshrl.u32 %v415, 16
        %v477 = vor.u32 %v475, %v473
        %v479 = vshll.u32 %v416, 16
        %v481 = vrot.slane %v479, 1
        %v482 = vsel %vm462, %v477, %v481
        %v483 = vshrl.u32 %v416, 16
        %v485 = vor.u32 %v483, %v481
        %v487 = vshll.u32 %v417, 16
        %v489 = vrot.slane %v487, 1
        %v490 = vsel %vm462, %v485, %v489
        %v491 = vshrl.u32 %v417, 16
        %v493 = vor.u32 %v491, %v489
        %v495 = vshll.u32 %v418, 16
        %v497 = vrot.slane %v495, 1
        %v498 = vsel %vm462, %v493, %v497
        %v499 = vshrl.u32 %v418, 16
        %v501 = vor.u32 %v499, %v497
        %v503 = vshll.u32 %v419, 16
        %v505 = vrot.slane %v503, 1
        %v506 = vsel %vm462, %v501, %v505
        %v507 = vshrl.u32 %v419, 16
        %v509 = vor.u32 %v507, %v505
        %v511 = vshll.u32 %v420, 16
        %v513 = vrot.slane %v511, 1
        %v514 = vsel %vm462, %v509, %v513
        %v515 = vshrl.u32 %v420, 16
        %v517 = vor.u32 %v515, %v513
        %v519 = vshll.u32 %v421, 16
        %v521 = vrot.slane %v519, 1
        %v522 = vsel %vm462, %v517, %v521
        %v523 = vshrl.u32 %v421, 16
        %v525 = vor.u32 %v523, %v521
        %v527 = vshll.u32 %v381, 16
        %v529 = vrot.slane %v527, 1
        %v530 = vsel %vm462, %v525, %v529
        %v555 = vunpack.c.l.b16 %v446
        %v556 = vunpack.c.l.b16 %v447
        %v557 = vunpack.c.l.b16 %v448
        %v558 = vunpack.c.l.b16 %v449
        %v559 = vunpack.c.l.b16 %v450
        %v560 = vunpack.c.l.b16 %v451
        %v561 = vunpack.c.l.b16 %v452
        %v562 = vunpack.c.l.b16 %v453
        %v563 = vunpack.c.l.b16 %v454
        %v564 = vunpack.c.l.b16 %v455
        %v565 = vunpack.c.l.b16 %v456
        %v566 = vunpack.c.l.b16 %v457
        %v567 = vunpack.c.l.b16 %v458
        %v568 = vunpack.c.l.b16 %v459
        %v569 = vunpack.c.l.b16 %v460
        %v570 = vunpack.c.l.b16 %v461
        %v571 = vpack.c.b16 %v556, %v555
        %v572 = vpack.c.b16 %v558, %v557
        %v573 = vpack.c.b16 %v560, %v559
        %v574 = vpack.c.b16 %v562, %v561
        %v575 = vpack.c.b16 %v564, %v563
        %v576 = vpack.c.b16 %v566, %v565
        %v577 = vpack.c.b16 %v568, %v567
        %v578 = vpack.c.b16 %v570, %v569
        %587 = vmatpush.bf16.msra.mxu0 %v578
        %588 = vmatpush.bf16.msra.mxu0 %v577
        %589 = vmatpush.bf16.msra.mxu0 %v576
        %590 = vmatpush.bf16.msra.mxu0 %v575
        %591 = vmatpush.bf16.msra.mxu0 %v574
        %592 = vmatpush.bf16.msra.mxu0 %v573
        %593 = vmatpush.bf16.msra.mxu0 %v572
        %594 = vmatpush.bf16.msra.mxu0 %v571
        %595 = vmatmul.bf16.gmra.mxu0 %v474
        %v596 = vpop.f32.mrf.mxu0
        %v597 = vadd.f32 0.0, %v596
        %v598 = vpop.f32.mrf.mxu0
        %v599 = vadd.f32 0.0, %v598
        %600 = vmatmul.bf16.gmra.mxu0 %v482
        %v601 = vpop.f32.mrf.mxu0
        %v602 = vadd.f32 0.0, %v601
        %v603 = vpop.f32.mrf.mxu0
        %v604 = vadd.f32 0.0, %v603
        %605 = vmatmul.bf16.gmra.mxu0 %v490
        %v606 = vpop.f32.mrf.mxu0
        %v607 = vadd.f32 0.0, %v606
        %v608 = vpop.f32.mrf.mxu0
        %v609 = vadd.f32 0.0, %v608
        %610 = vmatmul.bf16.gmra.mxu0 %v498
        %v611 = vpop.f32.mrf.mxu0
        %v612 = vadd.f32 0.0, %v611
        %v613 = vpop.f32.mrf.mxu0
        %v614 = vadd.f32 0.0, %v613
        %615 = vmatmul.bf16.gmra.mxu0 %v506
        %v616 = vpop.f32.mrf.mxu0
        %v617 = vadd.f32 0.0, %v616
        %v618 = vpop.f32.mrf.mxu0
        %v619 = vadd.f32 0.0, %v618
        %620 = vmatmul.bf16.gmra.mxu0 %v514
        %v621 = vpop.f32.mrf.mxu0
        %v622 = vadd.f32 0.0, %v621
        %v623 = vpop.f32.mrf.mxu0
        %v624 = vadd.f32 0.0, %v623
        %625 = vmatmul.bf16.gmra.mxu0 %v522
        %v626 = vpop.f32.mrf.mxu0
        %v627 = vadd.f32 0.0, %v626
        %v628 = vpop.f32.mrf.mxu0
        %v629 = vadd.f32 0.0, %v628
        %630 = vmatmul.bf16.gmra.mxu0 %v530
        %v631 = vpop.f32.mrf.mxu0
        %v632 = vadd.f32 0.0, %v631
        %v633 = vpop.f32.mrf.mxu0
        %v634 = vadd.f32 0.0, %v633
        %635 = vdwg.mxu0
        %v652 = vunpack.c.l.b16 %v430
        %v653 = vunpack.c.l.b16 %v431
        %v654 = vunpack.c.l.b16 %v432
        %v655 = vunpack.c.l.b16 %v433
        %v656 = vunpack.c.l.b16 %v434
        %v657 = vunpack.c.l.b16 %v435
        %v658 = vunpack.c.l.b16 %v436
        %v659 = vunpack.c.l.b16 %v437
        %v660 = vunpack.c.l.b16 %v438
        %v661 = vunpack.c.l.b16 %v439
        %v662 = vunpack.c.l.b16 %v440
        %v663 = vunpack.c.l.b16 %v441
        %v664 = vunpack.c.l.b16 %v442
        %v665 = vunpack.c.l.b16 %v443
        %v666 = vunpack.c.l.b16 %v444
        %v667 = vunpack.c.l.b16 %v445
        %v668 = vpack.c.b16 %v653, %v652
        %v669 = vpack.c.b16 %v655, %v654
        %v670 = vpack.c.b16 %v657, %v656
        %v671 = vpack.c.b16 %v659, %v658
        %v672 = vpack.c.b16 %v661, %v660
        %v673 = vpack.c.b16 %v663, %v662
        %v674 = vpack.c.b16 %v665, %v664
        %v675 = vpack.c.b16 %v667, %v666
        %684 = vmatpush.bf16.msra.mxu0 %v675
        %685 = vmatpush.bf16.msra.mxu0 %v674
        %686 = vmatpush.bf16.msra.mxu0 %v673
        %687 = vmatpush.bf16.msra.mxu0 %v672
        %688 = vmatpush.bf16.msra.mxu0 %v671
        %689 = vmatpush.bf16.msra.mxu0 %v670
        %690 = vmatpush.bf16.msra.mxu0 %v669
        %691 = vmatpush.bf16.msra.mxu0 %v668
        %692 = vmatmul.bf16.gmra.mxu0 %v414
        %v693 = vpop.f32.mrf.mxu0
        %v694 = vadd.f32 %v597, %v693
        %v695 = vpop.f32.mrf.mxu0
        %v696 = vadd.f32 %v599, %v695
        %697 = vmatmul.bf16.gmra.mxu0 %v415
        %v698 = vpop.f32.mrf.mxu0
        %v699 = vadd.f32 %v602, %v698
        %v700 = vpop.f32.mrf.mxu0
        %v701 = vadd.f32 %v604, %v700
        %702 = vmatmul.bf16.gmra.mxu0 %v416
        %v703 = vpop.f32.mrf.mxu0
        %v704 = vadd.f32 %v607, %v703
        %v705 = vpop.f32.mrf.mxu0
        %v706 = vadd.f32 %v609, %v705
        %707 = vmatmul.bf16.gmra.mxu0 %v417
        %v708 = vpop.f32.mrf.mxu0
        %v709 = vadd.f32 %v612, %v708
        %v710 = vpop.f32.mrf.mxu0
        %v711 = vadd.f32 %v614, %v710
        %712 = vmatmul.bf16.gmra.mxu0 %v418
        %v713 = vpop.f32.mrf.mxu0
        %v714 = vadd.f32 %v617, %v713
        %v715 = vpop.f32.mrf.mxu0
        %v716 = vadd.f32 %v619, %v715
        %717 = vmatmul.bf16.gmra.mxu0 %v419
        %v718 = vpop.f32.mrf.mxu0
        %v719 = vadd.f32 %v622, %v718
        %v720 = vpop.f32.mrf.mxu0
        %v721 = vadd.f32 %v624, %v720
        %722 = vmatmul.bf16.gmra.mxu0 %v420
        %v723 = vpop.f32.mrf.mxu0
        %v724 = vadd.f32 %v627, %v723
        %v725 = vpop.f32.mrf.mxu0
        %v726 = vadd.f32 %v629, %v725
        %727 = vmatmul.bf16.gmra.mxu0 %v421
        %v728 = vpop.f32.mrf.mxu0
        %v729 = vadd.f32 %v632, %v728
        %v730 = vpop.f32.mrf.mxu0
        %v731 = vadd.f32 %v634, %v730
        %732 = vdwg.mxu0
        %v733 = vld [vmem:[#allocation2 + $0x80] sm:$0xf]
        %v734 = vld [vmem:[#allocation2 + $0x84] sm:$0xf]
        %v735 = vld [vmem:[#allocation2 + $0x88] sm:$0xf]
        %v736 = vld [vmem:[#allocation2 + $0x8c] sm:$0xf]
        %v737 = vld [vmem:[#allocation2 + $0x90] sm:$0xf]
        %v738 = vld [vmem:[#allocation2 + $0x94] sm:$0xf]
        %v739 = vld [vmem:[#allocation2 + $0x98] sm:$0xf]
        %v740 = vld [vmem:[#allocation2 + $0x9c] sm:$0xf]
        %v741 = vld [vmem:[#allocation2 + $0xa0] sm:$0xf]
        %v742 = vld [vmem:[#allocation2 + $0xa4] sm:$0xf]
        %v743 = vld [vmem:[#allocation2 + $0xa8] sm:$0xf]
        %v744 = vld [vmem:[#allocation2 + $0xac] sm:$0xf]
        %v745 = vld [vmem:[#allocation2 + $0xb0] sm:$0xf]
        %v746 = vld [vmem:[#allocation2 + $0xb4] sm:$0xf]
        %v747 = vld [vmem:[#allocation2 + $0xb8] sm:$0xf]
        %v748 = vld [vmem:[#allocation2 + $0xbc] sm:$0xf]
        %vm750 = vcmask 1046528
        %v751 = vrot.slane %v414, 1
        %v752 = vrot.slane %v415, 1
        %v753 = vsel %vm750, %v751, %v752
        %v754 = vrot.slane %v416, 1
        %v755 = vsel %vm750, %v752, %v754
        %v756 = vrot.slane %v417, 1
        %v757 = vsel %vm750, %v754, %v756
        %v758 = vrot.slane %v418, 1
        %v759 = vsel %vm750, %v756, %v758
        %v760 = vrot.slane %v419, 1
        %v761 = vsel %vm750, %v758, %v760
        %v762 = vrot.slane %v420, 1
        %v763 = vsel %vm750, %v760, %v762
        %v764 = vrot.slane %v421, 1
        %v765 = vsel %vm750, %v762, %v764
        %v766 = vrot.slane %v381, 1
        %v767 = vsel %vm750, %v764, %v766
        %v792 = vunpack.c.l.b16 %v733
        %v793 = vunpack.c.l.b16 %v734
        %v794 = vunpack.c.l.b16 %v735
        %v795 = vunpack.c.l.b16 %v736
        %v796 = vunpack.c.l.b16 %v737
        %v797 = vunpack.c.l.b16 %v738
        %v798 = vunpack.c.l.b16 %v739
        %v799 = vunpack.c.l.b16 %v740
        %v800 = vunpack.c.l.b16 %v741
        %v801 = vunpack.c.l.b16 %v742
        %v802 = vunpack.c.l.b16 %v743
        %v803 = vunpack.c.l.b16 %v744
        %v804 = vunpack.c.l.b16 %v745
        %v805 = vunpack.c.l.b16 %v746
        %v806 = vunpack.c.l.b16 %v747
        %v807 = vunpack.c.l.b16 %v748
        %v808 = vpack.c.b16 %v793, %v792
        %v809 = vpack.c.b16 %v795, %v794
        %v810 = vpack.c.b16 %v797, %v796
        %v811 = vpack.c.b16 %v799, %v798
        %v812 = vpack.c.b16 %v801, %v800
        %v813 = vpack.c.b16 %v803, %v802
        %v814 = vpack.c.b16 %v805, %v804
        %v815 = vpack.c.b16 %v807, %v806
        %824 = vmatpush.bf16.msra.mxu0 %v815
        %825 = vmatpush.bf16.msra.mxu0 %v814
        %826 = vmatpush.bf16.msra.mxu0 %v813
        %827 = vmatpush.bf16.msra.mxu0 %v812
        %828 = vmatpush.bf16.msra.mxu0 %v811
        %829 = vmatpush.bf16.msra.mxu0 %v810
        %830 = vmatpush.bf16.msra.mxu0 %v809
        %831 = vmatpush.bf16.msra.mxu0 %v808
        %832 = vmatmul.bf16.gmra.mxu0 %v753
        %v833 = vpop.f32.mrf.mxu0
        %v834 = vadd.f32 0.0, %v833
        %v835 = vpop.f32.mrf.mxu0
        %v836 = vadd.f32 0.0, %v835
        %837 = vmatmul.bf16.gmra.mxu0 %v755
        %v838 = vpop.f32.mrf.mxu0
        %v839 = vadd.f32 0.0, %v838
        %v840 = vpop.f32.mrf.mxu0
        %v841 = vadd.f32 0.0, %v840
        %842 = vmatmul.bf16.gmra.mxu0 %v757
        %v843 = vpop.f32.mrf.mxu0
        %v844 = vadd.f32 0.0, %v843
        %v845 = vpop.f32.mrf.mxu0
        %v846 = vadd.f32 0.0, %v845
        %847 = vmatmul.bf16.gmra.mxu0 %v759
        %v848 = vpop.f32.mrf.mxu0
        %v849 = vadd.f32 0.0, %v848
        %v850 = vpop.f32.mrf.mxu0
        %v851 = vadd.f32 0.0, %v850
        %852 = vmatmul.bf16.gmra.mxu0 %v761
        %v853 = vpop.f32.mrf.mxu0
        %v854 = vadd.f32 0.0, %v853
        %v855 = vpop.f32.mrf.mxu0
        %v856 = vadd.f32 0.0, %v855
        %857 = vmatmul.bf16.gmra.mxu0 %v763
        %v858 = vpop.f32.mrf.mxu0
        %v859 = vadd.f32 0.0, %v858
        %v860 = vpop.f32.mrf.mxu0
        %v861 = vadd.f32 0.0, %v860
        %862 = vmatmul.bf16.gmra.mxu0 %v765
        %v863 = vpop.f32.mrf.mxu0
        %v864 = vadd.f32 0.0, %v863
        %v865 = vpop.f32.mrf.mxu0
        %v866 = vadd.f32 0.0, %v865
        %867 = vmatmul.bf16.gmra.mxu0 %v767
        %v868 = vpop.f32.mrf.mxu0
        %v869 = vadd.f32 0.0, %v868
        %v870 = vpop.f32.mrf.mxu0
        %v871 = vadd.f32 0.0, %v870
        %872 = vdwg.mxu0
        %v873 = vadd.f32 %v694, %v834
        %v874 = vadd.f32 %v696, %v836
        %v875 = vadd.f32 %v699, %v839
        %v876 = vadd.f32 %v701, %v841
        %v877 = vadd.f32 %v704, %v844
        %v878 = vadd.f32 %v706, %v846
        %v879 = vadd.f32 %v709, %v849
        %v880 = vadd.f32 %v711, %v851
        %v881 = vadd.f32 %v714, %v854
        %v882 = vadd.f32 %v716, %v856
        %v883 = vadd.f32 %v719, %v859
        %v884 = vadd.f32 %v721, %v861
        %v885 = vadd.f32 %v724, %v864
        %v886 = vadd.f32 %v726, %v866
        %v887 = vadd.f32 %v729, %v869
        %v888 = vadd.f32 %v731, %v871
        %v889 = vld [vmem:[%s3] sm:$0x1]
        %v891 = vperm.slane %v889, 0
        %v893 = vadd.f32 %v873, %v891
        %v894 = vadd.f32 %v874, %v891
        %v895 = vadd.f32 %v875, %v891
        %v896 = vadd.f32 %v876, %v891
        %v897 = vadd.f32 %v877, %v891
        %v898 = vadd.f32 %v878, %v891
        %v899 = vadd.f32 %v879, %v891
        %v900 = vadd.f32 %v880, %v891
        %v901 = vadd.f32 %v881, %v891
        %v902 = vadd.f32 %v882, %v891
        %v903 = vadd.f32 %v883, %v891
        %v904 = vadd.f32 %v884, %v891
        %v905 = vadd.f32 %v885, %v891
        %v906 = vadd.f32 %v886, %v891
        %v907 = vadd.f32 %v887, %v891
        %v908 = vadd.f32 %v888, %v891
        %v909 = vpack.c.bf16 %v893, %v893
        %v910 = vpack.c.bf16 %v894, %v894
        %v911 = vpack.c.bf16 %v895, %v895
        %v912 = vpack.c.bf16 %v896, %v896
        %v913 = vpack.c.bf16 %v897, %v897
        %v914 = vpack.c.bf16 %v898, %v898
        %v915 = vpack.c.bf16 %v899, %v899
        %v916 = vpack.c.bf16 %v900, %v900
        %v917 = vpack.c.bf16 %v901, %v901
        %v918 = vpack.c.bf16 %v902, %v902
        %v919 = vpack.c.bf16 %v903, %v903
        %v920 = vpack.c.bf16 %v904, %v904
        %v921 = vpack.c.bf16 %v905, %v905
        %v922 = vpack.c.bf16 %v906, %v906
        %v923 = vpack.c.bf16 %v907, %v907
        %v924 = vpack.c.bf16 %v908, %v908
        %925 = vst [vmem:[%s356] sm:$0xf] %v909
        %926 = vst [vmem:[%s356 + $0x4] sm:$0xf] %v910
        %927 = vst [vmem:[%s356 + $0x8] sm:$0xf] %v911
        %928 = vst [vmem:[%s356 + $0xc] sm:$0xf] %v912
        %929 = vst [vmem:[%s356 + $0x10] sm:$0xf] %v913
        %930 = vst [vmem:[%s356 + $0x14] sm:$0xf] %v914
        %931 = vst [vmem:[%s356 + $0x18] sm:$0xf] %v915
        %932 = vst [vmem:[%s356 + $0x1c] sm:$0xf] %v916
        %933 = vst [vmem:[%s356 + $0x20] sm:$0xf] %v917
        %934 = vst [vmem:[%s356 + $0x24] sm:$0xf] %v918
        %935 = vst [vmem:[%s356 + $0x28] sm:$0xf] %v919
        %936 = vst [vmem:[%s356 + $0x2c] sm:$0xf] %v920
        %937 = vst [vmem:[%s356 + $0x30] sm:$0xf] %v921
        %938 = vst [vmem:[%s356 + $0x34] sm:$0xf] %v922
        %939 = vst [vmem:[%s356 + $0x38] sm:$0xf] %v923
        %940 = vst [vmem:[%s356 + $0x3c] sm:$0xf] %v924
        %s941 = smul.u32 %s23, 128
        %v942 = vlaneseq
        %v943 = vshrl.u32 %v942, 7
        %v944 = vadd.s32 %v943, 8
        %v945 = vadd.s32 %v943, 16
        %v946 = vadd.s32 %v943, 24
        %v947 = vadd.s32 %v943, 32
        %v948 = vadd.s32 %v943, 40
        %v949 = vadd.s32 %v943, 48
        %v950 = vadd.s32 %v943, 56
        %v951 = vadd.s32 %v943, 64
        %v952 = vadd.s32 %v943, 72
        %v953 = vadd.s32 %v943, 80
        %v954 = vadd.s32 %v943, 88
        %v955 = vadd.s32 %v943, 96
        %v956 = vadd.s32 %v943, 104
        %v957 = vadd.s32 %v943, 112
        %v958 = vadd.s32 %v943, 120
        %v959 = vstv %s941
        %v960 = vadd.s32 %v959, %v943
        %v961 = vadd.s32 %v959, %v944
        %v962 = vadd.s32 %v959, %v945
        %v963 = vadd.s32 %v959, %v946
        %v964 = vadd.s32 %v959, %v947
        %v965 = vadd.s32 %v959, %v948
        %v966 = vadd.s32 %v959, %v949
        %v967 = vadd.s32 %v959, %v950
        %v968 = vadd.s32 %v959, %v951
        %v969 = vadd.s32 %v959, %v952
        %v970 = vadd.s32 %v959, %v953
        %v971 = vadd.s32 %v959, %v954
        %v972 = vadd.s32 %v959, %v955
        %v973 = vadd.s32 %v959, %v956
        %v974 = vadd.s32 %v959, %v957
        %v975 = vadd.s32 %v959, %v958
        %vm976 = vcmp.lt.s32.totalorder %v960, 16
        %vm977 = vcmp.lt.s32.totalorder %v961, 16
        %vm978 = vcmp.lt.s32.totalorder %v962, 16
        %vm979 = vcmp.lt.s32.totalorder %v963, 16
        %vm980 = vcmp.lt.s32.totalorder %v964, 16
        %vm981 = vcmp.lt.s32.totalorder %v965, 16
        %vm982 = vcmp.lt.s32.totalorder %v966, 16
        %vm983 = vcmp.lt.s32.totalorder %v967, 16
        %vm984 = vcmp.lt.s32.totalorder %v968, 16
        %vm985 = vcmp.lt.s32.totalorder %v969, 16
        %vm986 = vcmp.lt.s32.totalorder %v970, 16
        %vm987 = vcmp.lt.s32.totalorder %v971, 16
        %vm988 = vcmp.lt.s32.totalorder %v972, 16
        %vm989 = vcmp.lt.s32.totalorder %v973, 16
        %vm990 = vcmp.lt.s32.totalorder %v974, 16
        %vm991 = vcmp.lt.s32.totalorder %v975, 16
        %v992 = vsel %vm976, 1, 0
        %v993 = vsel %vm977, 1, 0
        %v994 = vsel %vm978, 1, 0
        %v995 = vsel %vm979, 1, 0
        %v996 = vsel %vm980, 1, 0
        %v997 = vsel %vm981, 1, 0
        %v998 = vsel %vm982, 1, 0
        %v999 = vsel %vm983, 1, 0
        %v1000 = vsel %vm984, 1, 0
        %v1001 = vsel %vm985, 1, 0
        %v1002 = vsel %vm986, 1, 0
        %v1003 = vsel %vm987, 1, 0
        %v1004 = vsel %vm988, 1, 0
        %v1005 = vsel %vm989, 1, 0
        %v1006 = vsel %vm990, 1, 0
        %v1007 = vsel %vm991, 1, 0
        %vm1008 = vcmp.eq.s32.totalorder %v992, 1
        %vm1009 = vcmp.eq.s32.totalorder %v993, 1
        %vm1010 = vcmp.eq.s32.totalorder %v994, 1
        %vm1011 = vcmp.eq.s32.totalorder %v995, 1
        %vm1012 = vcmp.eq.s32.totalorder %v996, 1
        %vm1013 = vcmp.eq.s32.totalorder %v997, 1
        %vm1014 = vcmp.eq.s32.totalorder %v998, 1
        %vm1015 = vcmp.eq.s32.totalorder %v999, 1
        %vm1016 = vcmp.eq.s32.totalorder %v1000, 1
        %vm1017 = vcmp.eq.s32.totalorder %v1001, 1
        %vm1018 = vcmp.eq.s32.totalorder %v1002, 1
        %vm1019 = vcmp.eq.s32.totalorder %v1003, 1
        %vm1020 = vcmp.eq.s32.totalorder %v1004, 1
        %vm1021 = vcmp.eq.s32.totalorder %v1005, 1
        %vm1022 = vcmp.eq.s32.totalorder %v1006, 1
        %vm1023 = vcmp.eq.s32.totalorder %v1007, 1
        %v1024 = vsel %vm1008, %v893, 0.0
        %v1025 = vsel %vm1009, %v894, 0.0
        %v1026 = vsel %vm1010, %v895, 0.0
        %v1027 = vsel %vm1011, %v896, 0.0
        %v1028 = vsel %vm1012, %v897, 0.0
        %v1029 = vsel %vm1013, %v898, 0.0
        %v1030 = vsel %vm1014, %v899, 0.0
        %v1031 = vsel %vm1015, %v900, 0.0
        %v1032 = vsel %vm1016, %v901, 0.0
        %v1033 = vsel %vm1017, %v902, 0.0
        %v1034 = vsel %vm1018, %v903, 0.0
        %v1035 = vsel %vm1019, %v904, 0.0
        %v1036 = vsel %vm1020, %v905, 0.0
        %v1037 = vsel %vm1021, %v906, 0.0
        %v1038 = vsel %vm1022, %v907, 0.0
        %v1039 = vsel %vm1023, %v908, 0.0
        %v1040 = vadd.f32 %v1024, %v1025
        %v1041 = vadd.f32 %v1040, %v1026
        %v1042 = vadd.f32 %v1041, %v1027
        %v1043 = vadd.f32 %v1042, %v1028
        %v1044 = vadd.f32 %v1043, %v1029
        %v1045 = vadd.f32 %v1044, %v1030
        %v1046 = vadd.f32 %v1045, %v1031
        %v1047 = vadd.f32 %v1046, %v1032
        %v1048 = vadd.f32 %v1047, %v1033
        %v1049 = vadd.f32 %v1048, %v1034
        %v1050 = vadd.f32 %v1049, %v1035
        %v1051 = vadd.f32 %v1050, %v1036
        %v1052 = vadd.f32 %v1051, %v1037
        %v1053 = vadd.f32 %v1052, %v1038
        %v1054 = vadd.f32 %v1053, %v1039
        %v1055 = vrot.slane %v1054, 4
        %v1056 = vadd.f32 %v1054, %v1055
        %v1057 = vrot.slane %v1056, 2
        %v1058 = vadd.f32 %v1056, %v1057
        %v1059 = vrot.slane %v1058, 1
        %v1060 = vadd.f32 %v1058, %v1059
        %v1061 = vmul.f32 %v1024, %v1024
        %v1062 = vmul.f32 %v1025, %v1025
        %v1063 = vmul.f32 %v1026, %v1026
        %v1064 = vmul.f32 %v1027, %v1027
        %v1065 = vmul.f32 %v1028, %v1028
        %v1066 = vmul.f32 %v1029, %v1029
        %v1067 = vmul.f32 %v1030, %v1030
        %v1068 = vmul.f32 %v1031, %v1031
        %v1069 = vmul.f32 %v1032, %v1032
        %v1070 = vmul.f32 %v1033, %v1033
        %v1071 = vmul.f32 %v1034, %v1034
        %v1072 = vmul.f32 %v1035, %v1035
        %v1073 = vmul.f32 %v1036, %v1036
        %v1074 = vmul.f32 %v1037, %v1037
        %v1075 = vmul.f32 %v1038, %v1038
        %v1076 = vmul.f32 %v1039, %v1039
        %v1077 = vadd.f32 %v1061, %v1062
        %v1078 = vadd.f32 %v1077, %v1063
        %v1079 = vadd.f32 %v1078, %v1064
        %v1080 = vadd.f32 %v1079, %v1065
        %v1081 = vadd.f32 %v1080, %v1066
        %v1082 = vadd.f32 %v1081, %v1067
        %v1083 = vadd.f32 %v1082, %v1068
        %v1084 = vadd.f32 %v1083, %v1069
        %v1085 = vadd.f32 %v1084, %v1070
        %v1086 = vadd.f32 %v1085, %v1071
        %v1087 = vadd.f32 %v1086, %v1072
        %v1088 = vadd.f32 %v1087, %v1073
        %v1089 = vadd.f32 %v1088, %v1074
        %v1090 = vadd.f32 %v1089, %v1075
        %v1091 = vadd.f32 %v1090, %v1076
        %v1092 = vrot.slane %v1091, 4
        %v1093 = vadd.f32 %v1091, %v1092
        %v1094 = vrot.slane %v1093, 2
        %v1095 = vadd.f32 %v1093, %v1094
        %v1096 = vrot.slane %v1095, 1
        %v1097 = vadd.f32 %v1095, %v1096
        %vm1098 = vcmask 1040384
        %v1099 = vsel %vm1098, %v1060, %v1097
        %vm1100 = vcmask 1041408
        %v1101 = vsel %vm1100, %v1099, 0.0
        %1102 = vst [vmem:[%s364] sm:$0xff] %v1101
        %s1103 = smul.u32 16, %s23
        %p1104 = scmp.lt.s32.totalorder %s22, 1
        %s1105 = scalar_select %p1104, %s22, 1
        %p1106 = scmp.lt.s32.totalorder %s1103, 15
        %s1107 = scalar_select %p1106, %s1103, 15
        %s1108 = smul.addr %s1105, 16
        %s1109 = sadd.s32 %s1107, %s1108
        %s1110 = smul.addr %s1109, 4
        %s1111 = scalar_lea.vmem %s4, %s1110
        %p1112 = scmp.lt.s32.totalorder %s22, 1
        %s1113 = scalar_select %p1112, %s22, 1
        %p1114 = scmp.lt.s32.totalorder %s23, 0
        %s1115 = scalar_select %p1114, %s23, 0
        %s1116 = sadd.s32 %s1115, %s1113
        %s1117 = smul.addr %s1116, 8
        %s1118 = scalar_lea.vmem %s5, %s1117
        // Predicated region
        $region41: #{_lambda_.4} parent=35 // pred_check
          %p1119 = pneg %p152
        $region42: #{_lambda_.4} parent=35 // pred_check_branch
          %1121 = sbr.rel (%p1119) target = $region44
        $region43: #{_lambda_.4} parent=35 // pred_region
          %s1122 = smul.u32 16, %s23
        $region44: #{_lambda_.4} parent=35 // pred_fallthru
          _
        // Predicated region
        $region45: #{_lambda_.4} parent=35 // pred_check
          %p1123 = pneg %p180
        $region46: #{_lambda_.4} parent=35 // pred_check_branch
          %1125 = sbr.rel (%p1123) target = $region48
        $region47: #{_lambda_.4} parent=35 // pred_region
          _
        $region48: #{_lambda_.4} parent=35 // pred_fallthru
          _
      $region36: #{_lambda_.4} parent=5 // pred_fallthru
        _
      %p1126 = scmp.le.s32.totalorder 2, %s13
      // Predicated region
      $region49: #{_lambda_.4} parent=5 // pred_check
        %p1127 = pneg %p1126
      $region50: #{_lambda_.4} parent=5 // pred_check_branch
        %1129 = sbr.rel (%p1127) target = $region52
      $region51: #{_lambda_.4} parent=5 // pred_region
        %s1130 = ssub.s32 %s13, 2
        // Predicated region
        $region53: #{_lambda_.4} parent=51 // pred_check
          %p1131 = pneg %p158
        $region54: #{_lambda_.4} parent=51 // pred_check_branch
          %1133 = sbr.rel (%p1131) target = $region56
        $region55: #{_lambda_.4} parent=51 // pred_region
          %s1134 = smul.u32 16, %s25
          %p1135 = scmp.lt.s32.totalorder %s24, 1
          %s1136 = scalar_select %p1135, %s24, 1
          %p1137 = scmp.lt.s32.totalorder %s1134, 15
          %s1138 = scalar_select %p1137, %s1134, 15
          %s1139 = smul.addr %s1136, 16
          %s1140 = sadd.s32 %s1138, %s1139
          %s1141 = smul.addr %s1140, 4
          %s1142 = scalar_lea.vmem %s4, %s1141
        $region56: #{_lambda_.4} parent=51 // pred_fallthru
          _
        // Predicated region
        $region57: #{_lambda_.4} parent=51 // pred_check
          %p1143 = pneg %p186
        $region58: #{_lambda_.4} parent=51 // pred_check_branch
          %1145 = sbr.rel (%p1143) target = $region60
        $region59: #{_lambda_.4} parent=51 // pred_region
          %p1146 = scmp.lt.s32.totalorder %s24, 1
          %s1147 = scalar_select %p1146, %s24, 1
          %p1148 = scmp.lt.s32.totalorder %s25, 0
          %s1149 = scalar_select %p1148, %s25, 0
          %s1150 = sadd.s32 %s1149, %s1147
          %s1151 = smul.addr %s1150, 8
          %s1152 = scalar_lea.vmem %s5, %s1151
        $region60: #{_lambda_.4} parent=51 // pred_fallthru
          _
      $region52: #{_lambda_.4} parent=5 // pred_fallthru
        _
    $region6: #{_lambda_.4} parent=1 // loop_footer
      %s17 = sadd.s32 1, %s13
    $region7: #{_lambda_.4} parent=1 // loop_footer_branch
      %12 = sbr.rel target = $region3
    $region8: #{_lambda_.4} parent=1 // loop_exit
      _
    %1153 = vsyncpa [#allocation3], 1
    %s1154 = scalar_lea.sflag [#allocation3], 1
    %1155 = vsyncpa %s1154, 1

// kernel: _lambda_.6
$region0: #{_lambda_.6}
  #allocation0 [shape = 'u32[]', space=smem, size = 0x4, offset = 0x4, fixed_abs, tag = 'smem constant byte address 0x4 - core index']
  #allocation1 [shape = 'u32[72,128]{1,0:T(1,128)}', space=vmem, size = 0x9000, scoped, tag = 'internal scratch']
  %s0 = inlined_call_operand.vmem [shape: bf16[2,136,128], index: 0, kind: input, shape index: {}, may-alias: {0,1}]
  %s1 = inlined_call_operand.vmem [shape: bf16[2,136,128], index: 1, kind: input, shape index: {}, may-alias: {0,1}]
  %s2 = inlined_call_operand.vmem [shape: bf16[384,128], index: 2, kind: input, shape index: {}]
  %s3 = inlined_call_operand.vmem [shape: f32[1,128], index: 3, kind: input, shape index: {}]
  %s4 = inlined_call_operand.vmem [shape: bf16[2,128,128], index: 4, kind: output, shape index: {0}]
  %s5 = inlined_call_operand.vmem [shape: f32[2,1,8,128], index: 5, kind: output, shape index: {1}]
  %6 = xla_tuple %s4, %s5
  %s7 = sld [smem:[#allocation0]]
  $region57: #{_lambda_.6} parent=0
    _
  %s9 = ssub.s32 1, %s7
  %s10 = scalar_select 0, %s9, %s7
  loop: start=0, step=1, limit=4
  $region2: #{_lambda_.6} parent=0 // loop_pre_header
    _
  $region3: #{_lambda_.6} parent=0 // loop_header
    %s12 = sphi 0, %s16
    %p13 = scmp.ge.s32.totalorder %s12, 4
    %s19 = sphi 0, %s31
    %s20 = sphi 0, %s27
    %s21 = sphi 0, %s19
    %s22 = sphi 0, %s20
    %s23 = sphi 0, %s21
    %s24 = sphi 0, %s22
    %s36 = sphi 0, %s38
    %s39 = sphi 0, %s36
    %s40 = sphi 0, %s39
    %s56 = sphi 0, %s40
    %s68 = sphi 0, %s70
    %s71 = sphi 0, %s68
    %s72 = sphi 0, %s71
    %s88 = sphi 0, %s72
    %s92 = sphi 0, %s92
    %s94 = sphi 0, %s92
    %s95 = sphi 0, %s94
    %s109 = sphi 0, %s95
    %s113 = sphi 0, %s113
    %s115 = sphi 0, %s113
    %s116 = sphi 0, %s115
    %s130 = sphi 0, %s116
    %s138 = sphi 0, %s140
    %s141 = sphi 0, %s138
    %s142 = sphi 0, %s141
    %s158 = sphi 0, %s142
    %s166 = sphi 0, %s168
    %s169 = sphi 0, %s166
    %s170 = sphi 0, %s169
    %s186 = sphi 0, %s170
  $region4: #{_lambda_.6} parent=0 // loop_header_branch
    %15 = sbr.rel (%p13) target = $region8
  $region5: #{_lambda_.6} parent=0 // loop_body
    %s17 = ssub.s32 %s12, 1
    %s18 = ssub.s32 %s12, 2
    %s25 = sadd.s32 1, %s20
    %p26 = scmp.ge.s32.totalorder %s25, 1
    %s27 = scalar_select %p26, 0, %s25
    %s28 = sadd.s32 1, %s19
    %s29 = scalar_select %p26, %s28, %s19
    %p30 = scmp.ge.s32.totalorder %s29, 2
    %s31 = scalar_select %p30, 0, %s29
    %s32 = ssub.s32 %s19, %s31
    %s33 = ssub.s32 %s20, %s27
    %s34 = sor.u32 %s32, %s33
    %p35 = scmp.eq.s32.totalorder %s34, 0
    %s37 = sadd.s32 %s36, 1
    %s38 = scalar_select %p35, %s36, %s37
    %p41 = pneg %p35
    %p42 = scmp.eq.s32.totalorder %s12, 1
    %p43 = por %p41, %p42
    %p44 = scmp.ne.s32.totalorder %s36, %s39
    %p45 = scmp.eq.s32.totalorder %s12, 0
    %p46 = por %p44, %p45
    %p47 = scmp.ne.s32.totalorder %s36, %s39
    %p48 = scmp.eq.s32.totalorder %s17, 1
    %p49 = por %p47, %p48
    %p50 = scmp.ne.s32.totalorder %s39, %s40
    %p51 = scmp.eq.s32.totalorder %s17, 0
    %p52 = por %p50, %p51
    %p53 = scmp.ne.s32.totalorder %s39, %s40
    %p54 = scmp.eq.s32.totalorder %s18, 1
    %p55 = por %p53, %p54
    %p57 = scmp.ne.s32.totalorder %s40, %s56
    %p58 = scmp.eq.s32.totalorder %s18, 0
    %p59 = por %p57, %p58
    %s60 = sadd.s32 %s20, 1
    %s61 = smul.u32 %s60, 16
    %s62 = sadd.s32 %s27, 1
    %s63 = smul.u32 %s62, 16
    %s64 = ssub.s32 %s19, %s31
    %s65 = ssub.s32 %s61, %s63
    %s66 = sor.u32 %s64, %s65
    %p67 = scmp.eq.s32.totalorder %s66, 0
    %s69 = sadd.s32 %s68, 1
    %s70 = scalar_select %p67, %s68, %s69
    %p73 = pneg %p67
    %p74 = scmp.eq.s32.totalorder %s12, 1
    %p75 = por %p73, %p74
    %p76 = scmp.ne.s32.totalorder %s68, %s71
    %p77 = scmp.eq.s32.totalorder %s12, 0
    %p78 = por %p76, %p77
    %p79 = scmp.ne.s32.totalorder %s68, %s71
    %p80 = scmp.eq.s32.totalorder %s17, 1
    %p81 = por %p79, %p80
    %p82 = scmp.ne.s32.totalorder %s71, %s72
    %p83 = scmp.eq.s32.totalorder %s17, 0
    %p84 = por %p82, %p83
    %p85 = scmp.ne.s32.totalorder %s71, %s72
    %p86 = scmp.eq.s32.totalorder %s18, 1
    %p87 = por %p85, %p86
    %p89 = scmp.ne.s32.totalorder %s72, %s88
    %p90 = scmp.eq.s32.totalorder %s18, 0
    %p91 = por %p89, %p90
    %s93 = sadd.s32 %s92, 1
    %p96 = scmp.eq.s32.totalorder %s12, 1
    %p97 = scmp.ne.s32.totalorder %s92, %s94
    %p98 = scmp.eq.s32.totalorder %s12, 0
    %p99 = por %p97, %p98
    %p100 = scmp.ne.s32.totalorder %s92, %s94
    %p101 = scmp.eq.s32.totalorder %s17, 1
    %p102 = por %p100, %p101
    %p103 = scmp.ne.s32.totalorder %s94, %s95
    %p104 = scmp.eq.s32.totalorder %s17, 0
    %p105 = por %p103, %p104
    %p106 = scmp.ne.s32.totalorder %s94, %s95
    %p107 = scmp.eq.s32.totalorder %s18, 1
    %p108 = por %p106, %p107
    %p110 = scmp.ne.s32.totalorder %s95, %s109
    %p111 = scmp.eq.s32.totalorder %s18, 0
    %p112 = por %p110, %p111
    %s114 = sadd.s32 %s113, 1
    %p117 = scmp.eq.s32.totalorder %s12, 1
    %p118 = scmp.ne.s32.totalorder %s113, %s115
    %p119 = scmp.eq.s32.totalorder %s12, 0
    %p120 = por %p118, %p119
    %p121 = scmp.ne.s32.totalorder %s113, %s115
    %p122 = scmp.eq.s32.totalorder %s17, 1
    %p123 = por %p121, %p122
    %p124 = scmp.ne.s32.totalorder %s115, %s116
    %p125 = scmp.eq.s32.totalorder %s17, 0
    %p126 = por %p124, %p125
    %p127 = scmp.ne.s32.totalorder %s115, %s116
    %p128 = scmp.eq.s32.totalorder %s18, 1
    %p129 = por %p127, %p128
    %p131 = scmp.ne.s32.totalorder %s116, %s130
    %p132 = scmp.eq.s32.totalorder %s18, 0
    %p133 = por %p131, %p132
    %s134 = ssub.s32 %s19, %s31
    %s135 = ssub.s32 %s20, %s27
    %s136 = sor.u32 %s134, %s135
    %p137 = scmp.eq.s32.totalorder %s136, 0
    %s139 = sadd.s32 %s138, 1
    %s140 = scalar_select %p137, %s138, %s139
    %p143 = pneg %p137
    %p144 = scmp.eq.s32.totalorder %s12, 1
    %p145 = por %p143, %p144
    %p146 = scmp.ne.s32.totalorder %s138, %s141
    %p147 = scmp.eq.s32.totalorder %s12, 0
    %p148 = por %p146, %p147
    %p149 = scmp.ne.s32.totalorder %s138, %s141
    %p150 = scmp.eq.s32.totalorder %s17, 1
    %p151 = por %p149, %p150
    %p152 = scmp.ne.s32.totalorder %s141, %s142
    %p153 = scmp.eq.s32.totalorder %s17, 0
    %p154 = por %p152, %p153
    %p155 = scmp.ne.s32.totalorder %s141, %s142
    %p156 = scmp.eq.s32.totalorder %s18, 1
    %p157 = por %p155, %p156
    %p159 = scmp.ne.s32.totalorder %s142, %s158
    %p160 = scmp.eq.s32.totalorder %s18, 0
    %p161 = por %p159, %p160
    %s162 = ssub.s32 %s19, %s31
    %s163 = ssub.s32 %s20, %s27
    %s164 = sor.u32 %s162, %s163
    %p165 = scmp.eq.s32.totalorder %s164, 0
    %s167 = sadd.s32 %s166, 1
    %s168 = scalar_select %p165, %s166, %s167
    %p171 = pneg %p165
    %p172 = scmp.eq.s32.totalorder %s12, 1
    %p173 = por %p171, %p172
    %p174 = scmp.ne.s32.totalorder %s166, %s169
    %p175 = scmp.eq.s32.totalorder %s12, 0
    %p176 = por %p174, %p175
    %p177 = scmp.ne.s32.totalorder %s166, %s169
    %p178 = scmp.eq.s32.totalorder %s17, 1
    %p179 = por %p177, %p178
    %p180 = scmp.ne.s32.totalorder %s169, %s170
    %p181 = scmp.eq.s32.totalorder %s17, 0
    %p182 = por %p180, %p181
    %p183 = scmp.ne.s32.totalorder %s169, %s170
    %p184 = scmp.eq.s32.totalorder %s18, 1
    %p185 = por %p183, %p184
    %p187 = scmp.ne.s32.totalorder %s170, %s186
    %p188 = scmp.eq.s32.totalorder %s18, 0
    %p189 = por %p187, %p188
    %p190 = scmp.le.s32.totalorder 1, %s12
    %p191 = scmp.lt.s32.totalorder %s12, 3
    %p192 = pnand %p190, %p191
    %p193 = pneg %p192
    // Predicated region
    $region9: #{_lambda_.6} parent=5 // pred_check
      _
    $region10: #{_lambda_.6} parent=5 // pred_check_branch
      %195 = sbr.rel (%p192) target = $region12
    $region11: #{_lambda_.6} parent=5 // pred_region
      %s196 = ssub.s32 %s12, 1
      // Predicated region
      $region13: #{_lambda_.6} parent=11 // pred_check
        %p197 = pneg %p105
      $region14: #{_lambda_.6} parent=11 // pred_check_branch
        %199 = sbr.rel (%p197) target = $region16
      $region15: #{_lambda_.6} parent=11 // pred_region
        _
      $region16: #{_lambda_.6} parent=11 // pred_fallthru
        _
      // Predicated region
      $region17: #{_lambda_.6} parent=11 // pred_check
        %p200 = pneg %p126
      $region18: #{_lambda_.6} parent=11 // pred_check_branch
        %202 = sbr.rel (%p200) target = $region20
      $region19: #{_lambda_.6} parent=11 // pred_region
        _
      $region20: #{_lambda_.6} parent=11 // pred_fallthru
        _
    $region12: #{_lambda_.6} parent=5 // pred_fallthru
      _
    %p203 = scmp.lt.s32.totalorder %s12, 2
    // Predicated region
    $region21: #{_lambda_.6} parent=5 // pred_check
      %p204 = pneg %p203
    $region22: #{_lambda_.6} parent=5 // pred_check_branch
      %206 = sbr.rel (%p204) target = $region24
    $region23: #{_lambda_.6} parent=5 // pred_region
      // Predicated region
      $region25: #{_lambda_.6} parent=23 // pred_check
        %p207 = pneg %p46
      $region26: #{_lambda_.6} parent=23 // pred_check_branch
        %209 = sbr.rel (%p207) target = $region28
      $region27: #{_lambda_.6} parent=23 // pred_region
        %s210 = smul.u32 16, %s20
        %s211 = ssub.s32 17, %s210
        %p212 = scmp.lt.s32.totalorder %s211, 16
        %s213 = scalar_select %p212, %s211, 16
        %s214 = smul.u32 4, %s213
        %p215 = scmp.lt.s32.totalorder %s19, 1
        %s216 = scalar_select %p215, %s19, 1
        %p217 = scmp.lt.s32.totalorder %s210, 16
        %s218 = scalar_select %p217, %s210, 16
        %s219 = smul.addr %s216, 17
        %s220 = sadd.s32 %s218, %s219
        %s221 = smul.addr %s220, 4
        %s222 = scalar_lea.vmem %s0, %s221
        %s223 = smul.u32 16, %s20
        %s224 = ssub.s32 17, %s223
        %p225 = scmp.lt.s32.totalorder %s224, 16
        %s226 = scalar_select %p225, %s224, 16
        %s227 = smul.u32 4, %s226
      $region28: #{_lambda_.6} parent=23 // pred_fallthru
        _
      // Predicated region
      $region29: #{_lambda_.6} parent=23 // pred_check
        %p228 = pneg %p78
      $region30: #{_lambda_.6} parent=23 // pred_check_branch
        %230 = sbr.rel (%p228) target = $region32
      $region31: #{_lambda_.6} parent=23 // pred_region
        %s231 = sadd.s32 %s20, 1
        %s232 = smul.u32 %s231, 16
        %p233 = scmp.lt.s32.totalorder %s19, 1
        %s234 = scalar_select %p233, %s19, 1
        %p235 = scmp.lt.s32.totalorder %s232, 16
        %s236 = scalar_select %p235, %s232, 16
        %s237 = smul.addr %s234, 17
        %s238 = sadd.s32 %s236, %s237
        %s239 = smul.addr %s238, 4
        %s240 = scalar_lea.vmem %s1, %s239
        %s241 = sadd.s32 %s20, 1
        %s242 = smul.u32 %s241, 16
      $region32: #{_lambda_.6} parent=23 // pred_fallthru
        _
    $region24: #{_lambda_.6} parent=5 // pred_fallthru
      _
    %p243 = scmp.le.s32.totalorder 1, %s12
    %p244 = scmp.lt.s32.totalorder %s12, 3
    %p245 = pnand %p243, %p244
    %p246 = pneg %p245
    // Predicated region
    $region33: #{_lambda_.6} parent=5 // pred_check
      _
    $region34: #{_lambda_.6} parent=5 // pred_check_branch
      %248 = sbr.rel (%p245) target = $region36
    $region35: #{_lambda_.6} parent=5 // pred_region
      %s249 = ssub.s32 %s12, 1
      %s250 = smul.u32 16, %s22
      %s251 = ssub.s32 17, %s250
      %p252 = scmp.lt.s32.totalorder %s251, 16
      %s253 = scalar_select %p252, %s251, 16
      %s254 = smul.u32 4, %s253
      %p255 = scmp.lt.s32.totalorder %s21, 1
      %s256 = scalar_select %p255, %s21, 1
      %p257 = scmp.lt.s32.totalorder %s250, 16
      %s258 = scalar_select %p257, %s250, 16
      %s259 = smul.addr %s256, 17
      %s260 = sadd.s32 %s258, %s259
      %s261 = smul.addr %s260, 4
      %s262 = scalar_lea.vmem %s0, %s261
      %p263 = pneg %p52
      %p264 = pneg %p49
      %s265 = sadd.s32 %s22, 1
      %s266 = smul.u32 %s265, 16
      %p267 = scmp.lt.s32.totalorder %s21, 1
      %s268 = scalar_select %p267, %s21, 1
      %p269 = scmp.lt.s32.totalorder %s266, 16
      %s270 = scalar_select %p269, %s266, 16
      %s271 = smul.addr %s268, 17
      %s272 = sadd.s32 %s270, %s271
      %s273 = smul.addr %s272, 4
      %s274 = scalar_lea.vmem %s1, %s273
      %p275 = pneg %p84
      %p276 = pneg %p81
      %p277 = pneg %p105
      %p278 = pneg %p102
      %p279 = pneg %p126
      %p280 = pneg %p123
      %p281 = pneg %p154
      %p282 = pneg %p151
      %s283 = smul.u32 16, %s22
      %p284 = scmp.lt.s32.totalorder %s21, 1
      %s285 = scalar_select %p284, %s21, 1
      %p286 = scmp.lt.s32.totalorder %s283, 15
      %s287 = scalar_select %p286, %s283, 15
      %s288 = smul.addr %s285, 16
      %s289 = sadd.s32 %s287, %s288
      %s290 = smul.addr %s289, 4
      %s291 = scalar_lea.vmem %s4, %s290
      %p292 = pneg %p182
      %p293 = pneg %p179
      %p294 = scmp.lt.s32.totalorder %s21, 1
      %s295 = scalar_select %p294, %s21, 1
      %p296 = scmp.lt.s32.totalorder %s22, 0
      %s297 = scalar_select %p296, %s22, 0
      %s298 = sadd.s32 %s297, %s295
      %s299 = smul.addr %s298, 8
      %s300 = scalar_lea.vmem %s5, %s299
      %s301 = smul.u32 16, %s22
      %s302 = ssub.s32 17, %s301
      %p303 = scmp.lt.s32.totalorder %s302, 16
      %s304 = scalar_select %p303, %s302, 16
      %s305 = smul.u32 4, %s304
      %p306 = scmp.lt.s32.totalorder %s21, 1
      %s307 = scalar_select %p306, %s21, 1
      %p308 = scmp.lt.s32.totalorder %s301, 16
      %s309 = scalar_select %p308, %s301, 16
      %s310 = smul.addr %s307, 17
      %s311 = sadd.s32 %s309, %s310
      %s312 = smul.addr %s311, 4
      %s313 = scalar_lea.vmem %s0, %s312
      %s314 = smul.u32 16, %s22
      %s315 = ssub.s32 17, %s314
      %p316 = scmp.lt.s32.totalorder %s315, 16
      %s317 = scalar_select %p316, %s315, 16
      %s318 = smul.u32 4, %s317
      %s319 = sadd.s32 %s22, 1
      %s320 = smul.u32 %s319, 16
      %p321 = scmp.lt.s32.totalorder %s21, 1
      %s322 = scalar_select %p321, %s21, 1
      %p323 = scmp.lt.s32.totalorder %s320, 16
      %s324 = scalar_select %p323, %s320, 16
      %s325 = smul.addr %s322, 17
      %s326 = sadd.s32 %s324, %s325
      %s327 = smul.addr %s326, 4
      %s328 = scalar_lea.vmem %s1, %s327
      %s329 = sadd.s32 %s22, 1
      %s330 = smul.u32 %s329, 16
      %s331 = smul.u32 16, %s22
      %p332 = scmp.lt.s32.totalorder %s21, 1
      %s333 = scalar_select %p332, %s21, 1
      %p334 = scmp.lt.s32.totalorder %s331, 15
      %s335 = scalar_select %p334, %s331, 15
      %s336 = smul.addr %s333, 16
      %s337 = sadd.s32 %s335, %s336
      %s338 = smul.addr %s337, 4
      %s339 = scalar_lea.vmem %s4, %s338
      %s340 = smul.u32 16, %s22
      %p341 = scmp.lt.s32.totalorder %s21, 1
      %s342 = scalar_select %p341, %s21, 1
      %p343 = scmp.lt.s32.totalorder %s22, 0
      %s344 = scalar_select %p343, %s22, 0
      %s345 = sadd.s32 %s344, %s342
      %s346 = smul.addr %s345, 8
      %s347 = scalar_lea.vmem %s5, %s346
      %v348 = vld [vmem:[%s313] sm:$0xf]
      %v349 = vld [vmem:[%s313 + $0x4] sm:$0xf]
      %v350 = vld [vmem:[%s313 + $0x8] sm:$0xf]
      %v351 = vld [vmem:[%s313 + $0xc] sm:$0xf]
      %v352 = vld [vmem:[%s313 + $0x10] sm:$0xf]
      %v353 = vld [vmem:[%s313 + $0x14] sm:$0xf]
      %v354 = vld [vmem:[%s313 + $0x18] sm:$0xf]
      %v355 = vld [vmem:[%s313 + $0x1c] sm:$0xf]
      %v356 = vld [vmem:[%s313 + $0x20] sm:$0xf]
      %v357 = vld [vmem:[%s313 + $0x24] sm:$0xf]
      %v358 = vld [vmem:[%s313 + $0x28] sm:$0xf]
      %v359 = vld [vmem:[%s313 + $0x2c] sm:$0xf]
      %v360 = vld [vmem:[%s313 + $0x30] sm:$0xf]
      %v361 = vld [vmem:[%s313 + $0x34] sm:$0xf]
      %v362 = vld [vmem:[%s313 + $0x38] sm:$0xf]
      %v363 = vld [vmem:[%s313 + $0x3c] sm:$0xf]
      %v364 = vld [vmem:[%s328] sm:$0xf]
      %v381 = vunpack.c.l.b16 %v348
      %v382 = vunpack.c.l.b16 %v349
      %v383 = vunpack.c.l.b16 %v350
      %v384 = vunpack.c.l.b16 %v351
      %v385 = vunpack.c.l.b16 %v352
      %v386 = vunpack.c.l.b16 %v353
      %v387 = vunpack.c.l.b16 %v354
      %v388 = vunpack.c.l.b16 %v355
      %v389 = vunpack.c.l.b16 %v356
      %v390 = vunpack.c.l.b16 %v357
      %v391 = vunpack.c.l.b16 %v358
      %v392 = vunpack.c.l.b16 %v359
      %v393 = vunpack.c.l.b16 %v360
      %v394 = vunpack.c.l.b16 %v361
      %v395 = vunpack.c.l.b16 %v362
      %v396 = vunpack.c.l.b16 %v363
      %v397 = vpack.c.b16 %v382, %v381
      %v398 = vpack.c.b16 %v384, %v383
      %v399 = vpack.c.b16 %v386, %v385
      %v400 = vpack.c.b16 %v388, %v387
      %v401 = vpack.c.b16 %v390, %v389
      %v402 = vpack.c.b16 %v392, %v391
      %v403 = vpack.c.b16 %v394, %v393
      %v404 = vpack.c.b16 %v396, %v395
      %v413 = vld [vmem:[%s2] sm:$0xf]
      %v414 = vld [vmem:[%s2 + $0x4] sm:$0xf]
      %v415 = vld [vmem:[%s2 + $0x8] sm:$0xf]
      %v416 = vld [vmem:[%s2 + $0xc] sm:$0xf]
      %v417 = vld [vmem:[%s2 + $0x10] sm:$0xf]
      %v418 = vld [vmem:[%s2 + $0x14] sm:$0xf]
      %v419 = vld [vmem:[%s2 + $0x18] sm:$0xf]
      %v420 = vld [vmem:[%s2 + $0x1c] sm:$0xf]
      %v421 = vld [vmem:[%s2 + $0x20] sm:$0xf]
      %v422 = vld [vmem:[%s2 + $0x24] sm:$0xf]
      %v423 = vld [vmem:[%s2 + $0x28] sm:$0xf]
      %v424 = vld [vmem:[%s2 + $0x2c] sm:$0xf]
      %v425 = vld [vmem:[%s2 + $0x30] sm:$0xf]
      %v426 = vld [vmem:[%s2 + $0x34] sm:$0xf]
      %v427 = vld [vmem:[%s2 + $0x38] sm:$0xf]
      %v428 = vld [vmem:[%s2 + $0x3c] sm:$0xf]
      %v429 = vld [vmem:[%s2 + $0x40] sm:$0xf]
      %v430 = vld [vmem:[%s2 + $0x44] sm:$0xf]
      %v431 = vld [vmem:[%s2 + $0x48] sm:$0xf]
      %v432 = vld [vmem:[%s2 + $0x4c] sm:$0xf]
      %v433 = vld [vmem:[%s2 + $0x50] sm:$0xf]
      %v434 = vld [vmem:[%s2 + $0x54] sm:$0xf]
      %v435 = vld [vmem:[%s2 + $0x58] sm:$0xf]
      %v436 = vld [vmem:[%s2 + $0x5c] sm:$0xf]
      %v437 = vld [vmem:[%s2 + $0x60] sm:$0xf]
      %v438 = vld [vmem:[%s2 + $0x64] sm:$0xf]
      %v439 = vld [vmem:[%s2 + $0x68] sm:$0xf]
      %v440 = vld [vmem:[%s2 + $0x6c] sm:$0xf]
      %v441 = vld [vmem:[%s2 + $0x70] sm:$0xf]
      %v442 = vld [vmem:[%s2 + $0x74] sm:$0xf]
      %v443 = vld [vmem:[%s2 + $0x78] sm:$0xf]
      %v444 = vld [vmem:[%s2 + $0x7c] sm:$0xf]
      %vm445 = vsmask.f32 7424
      %v447 = vshrl.u32 %v397, 16
      %v449 = vshll.u32 %v397, 16
      %v451 = vrot.slane %v449, 1
      %v452 = vor.u32 %v447, %v451
      %v454 = vshll.u32 %v398, 16
      %v456 = vrot.slane %v454, 1
      %v457 = vsel %vm445, %v452, %v456
      %v458 = vshrl.u32 %v398, 16
      %v460 = vor.u32 %v458, %v456
      %v462 = vshll.u32 %v399, 16
      %v464 = vrot.slane %v462, 1
      %v465 = vsel %vm445, %v460, %v464
      %v466 = vshrl.u32 %v399, 16
      %v468 = vor.u32 %v466, %v464
      %v470 = vshll.u32 %v400, 16
      %v472 = vrot.slane %v470, 1
      %v473 = vsel %vm445, %v468, %v472
      %v474 = vshrl.u32 %v400, 16
      %v476 = vor.u32 %v474, %v472
      %v478 = vshll.u32 %v401, 16
      %v480 = vrot.slane %v478, 1
      %v481 = vsel %vm445, %v476, %v480
      %v482 = vshrl.u32 %v401, 16
      %v484 = vor.u32 %v482, %v480
      %v486 = vshll.u32 %v402, 16
      %v488 = vrot.slane %v486, 1
      %v489 = vsel %vm445, %v484, %v488
      %v490 = vshrl.u32 %v402, 16
      %v492 = vor.u32 %v490, %v488
      %v494 = vshll.u32 %v403, 16
      %v496 = vrot.slane %v494, 1
      %v497 = vsel %vm445, %v492, %v496
      %v498 = vshrl.u32 %v403, 16
      %v500 = vor.u32 %v498, %v496
      %v502 = vshll.u32 %v404, 16
      %v504 = vrot.slane %v502, 1
      %v505 = vsel %vm445, %v500, %v504
      %v506 = vshrl.u32 %v404, 16
      %v508 = vor.u32 %v506, %v504
      %v510 = vshll.u32 %v364, 16
      %v512 = vrot.slane %v510, 1
      %v513 = vsel %vm445, %v508, %v512
      %v538 = vunpack.c.l.b16 %v429
      %v539 = vunpack.c.l.b16 %v430
      %v540 = vunpack.c.l.b16 %v431
      %v541 = vunpack.c.l.b16 %v432
      %v542 = vunpack.c.l.b16 %v433
      %v543 = vunpack.c.l.b16 %v434
      %v544 = vunpack.c.l.b16 %v435
      %v545 = vunpack.c.l.b16 %v436
      %v546 = vunpack.c.l.b16 %v437
      %v547 = vunpack.c.l.b16 %v438
      %v548 = vunpack.c.l.b16 %v439
      %v549 = vunpack.c.l.b16 %v440
      %v550 = vunpack.c.l.b16 %v441
      %v551 = vunpack.c.l.b16 %v442
      %v552 = vunpack.c.l.b16 %v443
      %v553 = vunpack.c.l.b16 %v444
      %v554 = vpack.c.b16 %v539, %v538
      %v555 = vpack.c.b16 %v541, %v540
      %v556 = vpack.c.b16 %v543, %v542
      %v557 = vpack.c.b16 %v545, %v544
      %v558 = vpack.c.b16 %v547, %v546
      %v559 = vpack.c.b16 %v549, %v548
      %v560 = vpack.c.b16 %v551, %v550
      %v561 = vpack.c.b16 %v553, %v552
      %570 = vmatpush.bf16.msra.mxu0 %v561
      %571 = vmatpush.bf16.msra.mxu0 %v560
      %572 = vmatpush.bf16.msra.mxu0 %v559
      %573 = vmatpush.bf16.msra.mxu0 %v558
      %574 = vmatpush.bf16.msra.mxu0 %v557
      %575 = vmatpush.bf16.msra.mxu0 %v556
      %576 = vmatpush.bf16.msra.mxu0 %v555
      %577 = vmatpush.bf16.msra.mxu0 %v554
      %578 = vmatmul.bf16.gmra.mxu0 %v457
      %v579 = vpop.f32.mrf.mxu0
      %v580 = vadd.f32 0.0, %v579
      %v581 = vpop.f32.mrf.mxu0
      %v582 = vadd.f32 0.0, %v581
      %583 = vmatmul.bf16.gmra.mxu0 %v465
      %v584 = vpop.f32.mrf.mxu0
      %v585 = vadd.f32 0.0, %v584
      %v586 = vpop.f32.mrf.mxu0
      %v587 = vadd.f32 0.0, %v586
      %588 = vmatmul.bf16.gmra.mxu0 %v473
      %v589 = vpop.f32.mrf.mxu0
      %v590 = vadd.f32 0.0, %v589
      %v591 = vpop.f32.mrf.mxu0
      %v592 = vadd.f32 0.0, %v591
      %593 = vmatmul.bf16.gmra.mxu0 %v481
      %v594 = vpop.f32.mrf.mxu0
      %v595 = vadd.f32 0.0, %v594
      %v596 = vpop.f32.mrf.mxu0
      %v597 = vadd.f32 0.0, %v596
      %598 = vmatmul.bf16.gmra.mxu0 %v489
      %v599 = vpop.f32.mrf.mxu0
      %v600 = vadd.f32 0.0, %v599
      %v601 = vpop.f32.mrf.mxu0
      %v602 = vadd.f32 0.0, %v601
      %603 = vmatmul.bf16.gmra.mxu0 %v497
      %v604 = vpop.f32.mrf.mxu0
      %v605 = vadd.f32 0.0, %v604
      %v606 = vpop.f32.mrf.mxu0
      %v607 = vadd.f32 0.0, %v606
      %608 = vmatmul.bf16.gmra.mxu0 %v505
      %v609 = vpop.f32.mrf.mxu0
      %v610 = vadd.f32 0.0, %v609
      %v611 = vpop.f32.mrf.mxu0
      %v612 = vadd.f32 0.0, %v611
      %613 = vmatmul.bf16.gmra.mxu0 %v513
      %v614 = vpop.f32.mrf.mxu0
      %v615 = vadd.f32 0.0, %v614
      %v616 = vpop.f32.mrf.mxu0
      %v617 = vadd.f32 0.0, %v616
      %618 = vdwg.mxu0
      %v635 = vunpack.c.l.b16 %v413
      %v636 = vunpack.c.l.b16 %v414
      %v637 = vunpack.c.l.b16 %v415
      %v638 = vunpack.c.l.b16 %v416
      %v639 = vunpack.c.l.b16 %v417
      %v640 = vunpack.c.l.b16 %v418
      %v641 = vunpack.c.l.b16 %v419
      %v642 = vunpack.c.l.b16 %v420
      %v643 = vunpack.c.l.b16 %v421
      %v644 = vunpack.c.l.b16 %v422
      %v645 = vunpack.c.l.b16 %v423
      %v646 = vunpack.c.l.b16 %v424
      %v647 = vunpack.c.l.b16 %v425
      %v648 = vunpack.c.l.b16 %v426
      %v649 = vunpack.c.l.b16 %v427
      %v650 = vunpack.c.l.b16 %v428
      %v651 = vpack.c.b16 %v636, %v635
      %v652 = vpack.c.b16 %v638, %v637
      %v653 = vpack.c.b16 %v640, %v639
      %v654 = vpack.c.b16 %v642, %v641
      %v655 = vpack.c.b16 %v644, %v643
      %v656 = vpack.c.b16 %v646, %v645
      %v657 = vpack.c.b16 %v648, %v647
      %v658 = vpack.c.b16 %v650, %v649
      %667 = vmatpush.bf16.msra.mxu0 %v658
      %668 = vmatpush.bf16.msra.mxu0 %v657
      %669 = vmatpush.bf16.msra.mxu0 %v656
      %670 = vmatpush.bf16.msra.mxu0 %v655
      %671 = vmatpush.bf16.msra.mxu0 %v654
      %672 = vmatpush.bf16.msra.mxu0 %v653
      %673 = vmatpush.bf16.msra.mxu0 %v652
      %674 = vmatpush.bf16.msra.mxu0 %v651
      %675 = vmatmul.bf16.gmra.mxu0 %v397
      %v676 = vpop.f32.mrf.mxu0
      %v677 = vadd.f32 %v580, %v676
      %v678 = vpop.f32.mrf.mxu0
      %v679 = vadd.f32 %v582, %v678
      %680 = vmatmul.bf16.gmra.mxu0 %v398
      %v681 = vpop.f32.mrf.mxu0
      %v682 = vadd.f32 %v585, %v681
      %v683 = vpop.f32.mrf.mxu0
      %v684 = vadd.f32 %v587, %v683
      %685 = vmatmul.bf16.gmra.mxu0 %v399
      %v686 = vpop.f32.mrf.mxu0
      %v687 = vadd.f32 %v590, %v686
      %v688 = vpop.f32.mrf.mxu0
      %v689 = vadd.f32 %v592, %v688
      %690 = vmatmul.bf16.gmra.mxu0 %v400
      %v691 = vpop.f32.mrf.mxu0
      %v692 = vadd.f32 %v595, %v691
      %v693 = vpop.f32.mrf.mxu0
      %v694 = vadd.f32 %v597, %v693
      %695 = vmatmul.bf16.gmra.mxu0 %v401
      %v696 = vpop.f32.mrf.mxu0
      %v697 = vadd.f32 %v600, %v696
      %v698 = vpop.f32.mrf.mxu0
      %v699 = vadd.f32 %v602, %v698
      %700 = vmatmul.bf16.gmra.mxu0 %v402
      %v701 = vpop.f32.mrf.mxu0
      %v702 = vadd.f32 %v605, %v701
      %v703 = vpop.f32.mrf.mxu0
      %v704 = vadd.f32 %v607, %v703
      %705 = vmatmul.bf16.gmra.mxu0 %v403
      %v706 = vpop.f32.mrf.mxu0
      %v707 = vadd.f32 %v610, %v706
      %v708 = vpop.f32.mrf.mxu0
      %v709 = vadd.f32 %v612, %v708
      %710 = vmatmul.bf16.gmra.mxu0 %v404
      %v711 = vpop.f32.mrf.mxu0
      %v712 = vadd.f32 %v615, %v711
      %v713 = vpop.f32.mrf.mxu0
      %v714 = vadd.f32 %v617, %v713
      %715 = vdwg.mxu0
      %v716 = vld [vmem:[%s2 + $0x80] sm:$0xf]
      %v717 = vld [vmem:[%s2 + $0x84] sm:$0xf]
      %v718 = vld [vmem:[%s2 + $0x88] sm:$0xf]
      %v719 = vld [vmem:[%s2 + $0x8c] sm:$0xf]
      %v720 = vld [vmem:[%s2 + $0x90] sm:$0xf]
      %v721 = vld [vmem:[%s2 + $0x94] sm:$0xf]
      %v722 = vld [vmem:[%s2 + $0x98] sm:$0xf]
      %v723 = vld [vmem:[%s2 + $0x9c] sm:$0xf]
      %v724 = vld [vmem:[%s2 + $0xa0] sm:$0xf]
      %v725 = vld [vmem:[%s2 + $0xa4] sm:$0xf]
      %v726 = vld [vmem:[%s2 + $0xa8] sm:$0xf]
      %v727 = vld [vmem:[%s2 + $0xac] sm:$0xf]
      %v728 = vld [vmem:[%s2 + $0xb0] sm:$0xf]
      %v729 = vld [vmem:[%s2 + $0xb4] sm:$0xf]
      %v730 = vld [vmem:[%s2 + $0xb8] sm:$0xf]
      %v731 = vld [vmem:[%s2 + $0xbc] sm:$0xf]
      %vm733 = vcmask 1046528
      %v734 = vrot.slane %v397, 1
      %v735 = vrot.slane %v398, 1
      %v736 = vsel %vm733, %v734, %v735
      %v737 = vrot.slane %v399, 1
      %v738 = vsel %vm733, %v735, %v737
      %v739 = vrot.slane %v400, 1
      %v740 = vsel %vm733, %v737, %v739
      %v741 = vrot.slane %v401, 1
      %v742 = vsel %vm733, %v739, %v741
      %v743 = vrot.slane %v402, 1
      %v744 = vsel %vm733, %v741, %v743
      %v745 = vrot.slane %v403, 1
      %v746 = vsel %vm733, %v743, %v745
      %v747 = vrot.slane %v404, 1
      %v748 = vsel %vm733, %v745, %v747
      %v749 = vrot.slane %v364, 1
      %v750 = vsel %vm733, %v747, %v749
      %v775 = vunpack.c.l.b16 %v716
      %v776 = vunpack.c.l.b16 %v717
      %v777 = vunpack.c.l.b16 %v718
      %v778 = vunpack.c.l.b16 %v719
      %v779 = vunpack.c.l.b16 %v720
      %v780 = vunpack.c.l.b16 %v721
      %v781 = vunpack.c.l.b16 %v722
      %v782 = vunpack.c.l.b16 %v723
      %v783 = vunpack.c.l.b16 %v724
      %v784 = vunpack.c.l.b16 %v725
      %v785 = vunpack.c.l.b16 %v726
      %v786 = vunpack.c.l.b16 %v727
      %v787 = vunpack.c.l.b16 %v728
      %v788 = vunpack.c.l.b16 %v729
      %v789 = vunpack.c.l.b16 %v730
      %v790 = vunpack.c.l.b16 %v731
      %v791 = vpack.c.b16 %v776, %v775
      %v792 = vpack.c.b16 %v778, %v777
      %v793 = vpack.c.b16 %v780, %v779
      %v794 = vpack.c.b16 %v782, %v781
      %v795 = vpack.c.b16 %v784, %v783
      %v796 = vpack.c.b16 %v786, %v785
      %v797 = vpack.c.b16 %v788, %v787
      %v798 = vpack.c.b16 %v790, %v789
      %807 = vmatpush.bf16.msra.mxu0 %v798
      %808 = vmatpush.bf16.msra.mxu0 %v797
      %809 = vmatpush.bf16.msra.mxu0 %v796
      %810 = vmatpush.bf16.msra.mxu0 %v795
      %811 = vmatpush.bf16.msra.mxu0 %v794
      %812 = vmatpush.bf16.msra.mxu0 %v793
      %813 = vmatpush.bf16.msra.mxu0 %v792
      %814 = vmatpush.bf16.msra.mxu0 %v791
      %815 = vmatmul.bf16.gmra.mxu0 %v736
      %v816 = vpop.f32.mrf.mxu0
      %v817 = vadd.f32 0.0, %v816
      %v818 = vpop.f32.mrf.mxu0
      %v819 = vadd.f32 0.0, %v818
      %820 = vmatmul.bf16.gmra.mxu0 %v738
      %v821 = vpop.f32.mrf.mxu0
      %v822 = vadd.f32 0.0, %v821
      %v823 = vpop.f32.mrf.mxu0
      %v824 = vadd.f32 0.0, %v823
      %825 = vmatmul.bf16.gmra.mxu0 %v740
      %v826 = vpop.f32.mrf.mxu0
      %v827 = vadd.f32 0.0, %v826
      %v828 = vpop.f32.mrf.mxu0
      %v829 = vadd.f32 0.0, %v828
      %830 = vmatmul.bf16.gmra.mxu0 %v742
      %v831 = vpop.f32.mrf.mxu0
      %v832 = vadd.f32 0.0, %v831
      %v833 = vpop.f32.mrf.mxu0
      %v834 = vadd.f32 0.0, %v833
      %835 = vmatmul.bf16.gmra.mxu0 %v744
      %v836 = vpop.f32.mrf.mxu0
      %v837 = vadd.f32 0.0, %v836
      %v838 = vpop.f32.mrf.mxu0
      %v839 = vadd.f32 0.0, %v838
      %840 = vmatmul.bf16.gmra.mxu0 %v746
      %v841 = vpop.f32.mrf.mxu0
      %v842 = vadd.f32 0.0, %v841
      %v843 = vpop.f32.mrf.mxu0
      %v844 = vadd.f32 0.0, %v843
      %845 = vmatmul.bf16.gmra.mxu0 %v748
      %v846 = vpop.f32.mrf.mxu0
      %v847 = vadd.f32 0.0, %v846
      %v848 = vpop.f32.mrf.mxu0
      %v849 = vadd.f32 0.0, %v848
      %850 = vmatmul.bf16.gmra.mxu0 %v750
      %v851 = vpop.f32.mrf.mxu0
      %v852 = vadd.f32 0.0, %v851
      %v853 = vpop.f32.mrf.mxu0
      %v854 = vadd.f32 0.0, %v853
      %855 = vdwg.mxu0
      %v856 = vadd.f32 %v677, %v817
      %v857 = vadd.f32 %v679, %v819
      %v858 = vadd.f32 %v682, %v822
      %v859 = vadd.f32 %v684, %v824
      %v860 = vadd.f32 %v687, %v827
      %v861 = vadd.f32 %v689, %v829
      %v862 = vadd.f32 %v692, %v832
      %v863 = vadd.f32 %v694, %v834
      %v864 = vadd.f32 %v697, %v837
      %v865 = vadd.f32 %v699, %v839
      %v866 = vadd.f32 %v702, %v842
      %v867 = vadd.f32 %v704, %v844
      %v868 = vadd.f32 %v707, %v847
      %v869 = vadd.f32 %v709, %v849
      %v870 = vadd.f32 %v712, %v852
      %v871 = vadd.f32 %v714, %v854
      %v872 = vld [vmem:[%s3] sm:$0x1]
      %v874 = vperm.slane %v872, 0
      %v876 = vadd.f32 %v856, %v874
      %v877 = vadd.f32 %v857, %v874
      %v878 = vadd.f32 %v858, %v874
      %v879 = vadd.f32 %v859, %v874
      %v880 = vadd.f32 %v860, %v874
      %v881 = vadd.f32 %v861, %v874
      %v882 = vadd.f32 %v862, %v874
      %v883 = vadd.f32 %v863, %v874
      %v884 = vadd.f32 %v864, %v874
      %v885 = vadd.f32 %v865, %v874
      %v886 = vadd.f32 %v866, %v874
      %v887 = vadd.f32 %v867, %v874
      %v888 = vadd.f32 %v868, %v874
      %v889 = vadd.f32 %v869, %v874
      %v890 = vadd.f32 %v870, %v874
      %v891 = vadd.f32 %v871, %v874
      %v892 = vpack.c.bf16 %v876, %v876
      %v893 = vpack.c.bf16 %v877, %v877
      %v894 = vpack.c.bf16 %v878, %v878
      %v895 = vpack.c.bf16 %v879, %v879
      %v896 = vpack.c.bf16 %v880, %v880
      %v897 = vpack.c.bf16 %v881, %v881
      %v898 = vpack.c.bf16 %v882, %v882
      %v899 = vpack.c.bf16 %v883, %v883
      %v900 = vpack.c.bf16 %v884, %v884
      %v901 = vpack.c.bf16 %v885, %v885
      %v902 = vpack.c.bf16 %v886, %v886
      %v903 = vpack.c.bf16 %v887, %v887
      %v904 = vpack.c.bf16 %v888, %v888
      %v905 = vpack.c.bf16 %v889, %v889
      %v906 = vpack.c.bf16 %v890, %v890
      %v907 = vpack.c.bf16 %v891, %v891
      %908 = vst [vmem:[%s339] sm:$0xf] %v892
      %909 = vst [vmem:[%s339 + $0x4] sm:$0xf] %v893
      %910 = vst [vmem:[%s339 + $0x8] sm:$0xf] %v894
      %911 = vst [vmem:[%s339 + $0xc] sm:$0xf] %v895
      %912 = vst [vmem:[%s339 + $0x10] sm:$0xf] %v896
      %913 = vst [vmem:[%s339 + $0x14] sm:$0xf] %v897
      %914 = vst [vmem:[%s339 + $0x18] sm:$0xf] %v898
      %915 = vst [vmem:[%s339 + $0x1c] sm:$0xf] %v899
      %916 = vst [vmem:[%s339 + $0x20] sm:$0xf] %v900
      %917 = vst [vmem:[%s339 + $0x24] sm:$0xf] %v901
      %918 = vst [vmem:[%s339 + $0x28] sm:$0xf] %v902
      %919 = vst [vmem:[%s339 + $0x2c] sm:$0xf] %v903
      %920 = vst [vmem:[%s339 + $0x30] sm:$0xf] %v904
      %921 = vst [vmem:[%s339 + $0x34] sm:$0xf] %v905
      %922 = vst [vmem:[%s339 + $0x38] sm:$0xf] %v906
      %923 = vst [vmem:[%s339 + $0x3c] sm:$0xf] %v907
      %s924 = smul.u32 %s22, 128
      %v925 = vlaneseq
      %v926 = vshrl.u32 %v925, 7
      %v927 = vadd.s32 %v926, 8
      %v928 = vadd.s32 %v926, 16
      %v929 = vadd.s32 %v926, 24
      %v930 = vadd.s32 %v926, 32
      %v931 = vadd.s32 %v926, 40
      %v932 = vadd.s32 %v926, 48
      %v933 = vadd.s32 %v926, 56
      %v934 = vadd.s32 %v926, 64
      %v935 = vadd.s32 %v926, 72
      %v936 = vadd.s32 %v926, 80
      %v937 = vadd.s32 %v926, 88
      %v938 = vadd.s32 %v926, 96
      %v939 = vadd.s32 %v926, 104
      %v940 = vadd.s32 %v926, 112
      %v941 = vadd.s32 %v926, 120
      %v942 = vstv %s924
      %v943 = vadd.s32 %v942, %v926
      %v944 = vadd.s32 %v942, %v927
      %v945 = vadd.s32 %v942, %v928
      %v946 = vadd.s32 %v942, %v929
      %v947 = vadd.s32 %v942, %v930
      %v948 = vadd.s32 %v942, %v931
      %v949 = vadd.s32 %v942, %v932
      %v950 = vadd.s32 %v942, %v933
      %v951 = vadd.s32 %v942, %v934
      %v952 = vadd.s32 %v942, %v935
      %v953 = vadd.s32 %v942, %v936
      %v954 = vadd.s32 %v942, %v937
      %v955 = vadd.s32 %v942, %v938
      %v956 = vadd.s32 %v942, %v939
      %v957 = vadd.s32 %v942, %v940
      %v958 = vadd.s32 %v942, %v941
      %vm959 = vcmp.lt.s32.totalorder %v943, 16
      %vm960 = vcmp.lt.s32.totalorder %v944, 16
      %vm961 = vcmp.lt.s32.totalorder %v945, 16
      %vm962 = vcmp.lt.s32.totalorder %v946, 16
      %vm963 = vcmp.lt.s32.totalorder %v947, 16
      %vm964 = vcmp.lt.s32.totalorder %v948, 16
      %vm965 = vcmp.lt.s32.totalorder %v949, 16
      %vm966 = vcmp.lt.s32.totalorder %v950, 16
      %vm967 = vcmp.lt.s32.totalorder %v951, 16
      %vm968 = vcmp.lt.s32.totalorder %v952, 16
      %vm969 = vcmp.lt.s32.totalorder %v953, 16
      %vm970 = vcmp.lt.s32.totalorder %v954, 16
      %vm971 = vcmp.lt.s32.totalorder %v955, 16
      %vm972 = vcmp.lt.s32.totalorder %v956, 16
      %vm973 = vcmp.lt.s32.totalorder %v957, 16
      %vm974 = vcmp.lt.s32.totalorder %v958, 16
      %v975 = vsel %vm959, 1, 0
      %v976 = vsel %vm960, 1, 0
      %v977 = vsel %vm961, 1, 0
      %v978 = vsel %vm962, 1, 0
      %v979 = vsel %vm963, 1, 0
      %v980 = vsel %vm964, 1, 0
      %v981 = vsel %vm965, 1, 0
      %v982 = vsel %vm966, 1, 0
      %v983 = vsel %vm967, 1, 0
      %v984 = vsel %vm968, 1, 0
      %v985 = vsel %vm969, 1, 0
      %v986 = vsel %vm970, 1, 0
      %v987 = vsel %vm971, 1, 0
      %v988 = vsel %vm972, 1, 0
      %v989 = vsel %vm973, 1, 0
      %v990 = vsel %vm974, 1, 0
      %vm991 = vcmp.eq.s32.totalorder %v975, 1
      %vm992 = vcmp.eq.s32.totalorder %v976, 1
      %vm993 = vcmp.eq.s32.totalorder %v977, 1
      %vm994 = vcmp.eq.s32.totalorder %v978, 1
      %vm995 = vcmp.eq.s32.totalorder %v979, 1
      %vm996 = vcmp.eq.s32.totalorder %v980, 1
      %vm997 = vcmp.eq.s32.totalorder %v981, 1
      %vm998 = vcmp.eq.s32.totalorder %v982, 1
      %vm999 = vcmp.eq.s32.totalorder %v983, 1
      %vm1000 = vcmp.eq.s32.totalorder %v984, 1
      %vm1001 = vcmp.eq.s32.totalorder %v985, 1
      %vm1002 = vcmp.eq.s32.totalorder %v986, 1
      %vm1003 = vcmp.eq.s32.totalorder %v987, 1
      %vm1004 = vcmp.eq.s32.totalorder %v988, 1
      %vm1005 = vcmp.eq.s32.totalorder %v989, 1
      %vm1006 = vcmp.eq.s32.totalorder %v990, 1
      %v1007 = vsel %vm991, %v876, 0.0
      %v1008 = vsel %vm992, %v877, 0.0
      %v1009 = vsel %vm993, %v878, 0.0
      %v1010 = vsel %vm994, %v879, 0.0
      %v1011 = vsel %vm995, %v880, 0.0
      %v1012 = vsel %vm996, %v881, 0.0
      %v1013 = vsel %vm997, %v882, 0.0
      %v1014 = vsel %vm998, %v883, 0.0
      %v1015 = vsel %vm999, %v884, 0.0
      %v1016 = vsel %vm1000, %v885, 0.0
      %v1017 = vsel %vm1001, %v886, 0.0
      %v1018 = vsel %vm1002, %v887, 0.0
      %v1019 = vsel %vm1003, %v888, 0.0
      %v1020 = vsel %vm1004, %v889, 0.0
      %v1021 = vsel %vm1005, %v890, 0.0
      %v1022 = vsel %vm1006, %v891, 0.0
      %v1023 = vadd.f32 %v1007, %v1008
      %v1024 = vadd.f32 %v1023, %v1009
      %v1025 = vadd.f32 %v1024, %v1010
      %v1026 = vadd.f32 %v1025, %v1011
      %v1027 = vadd.f32 %v1026, %v1012
      %v1028 = vadd.f32 %v1027, %v1013
      %v1029 = vadd.f32 %v1028, %v1014
      %v1030 = vadd.f32 %v1029, %v1015
      %v1031 = vadd.f32 %v1030, %v1016
      %v1032 = vadd.f32 %v1031, %v1017
      %v1033 = vadd.f32 %v1032, %v1018
      %v1034 = vadd.f32 %v1033, %v1019
      %v1035 = vadd.f32 %v1034, %v1020
      %v1036 = vadd.f32 %v1035, %v1021
      %v1037 = vadd.f32 %v1036, %v1022
      %v1038 = vrot.slane %v1037, 4
      %v1039 = vadd.f32 %v1037, %v1038
      %v1040 = vrot.slane %v1039, 2
      %v1041 = vadd.f32 %v1039, %v1040
      %v1042 = vrot.slane %v1041, 1
      %v1043 = vadd.f32 %v1041, %v1042
      %v1044 = vmul.f32 %v1007, %v1007
      %v1045 = vmul.f32 %v1008, %v1008
      %v1046 = vmul.f32 %v1009, %v1009
      %v1047 = vmul.f32 %v1010, %v1010
      %v1048 = vmul.f32 %v1011, %v1011
      %v1049 = vmul.f32 %v1012, %v1012
      %v1050 = vmul.f32 %v1013, %v1013
      %v1051 = vmul.f32 %v1014, %v1014
      %v1052 = vmul.f32 %v1015, %v1015
      %v1053 = vmul.f32 %v1016, %v1016
      %v1054 = vmul.f32 %v1017, %v1017
      %v1055 = vmul.f32 %v1018, %v1018
      %v1056 = vmul.f32 %v1019, %v1019
      %v1057 = vmul.f32 %v1020, %v1020
      %v1058 = vmul.f32 %v1021, %v1021
      %v1059 = vmul.f32 %v1022, %v1022
      %v1060 = vadd.f32 %v1044, %v1045
      %v1061 = vadd.f32 %v1060, %v1046
      %v1062 = vadd.f32 %v1061, %v1047
      %v1063 = vadd.f32 %v1062, %v1048
      %v1064 = vadd.f32 %v1063, %v1049
      %v1065 = vadd.f32 %v1064, %v1050
      %v1066 = vadd.f32 %v1065, %v1051
      %v1067 = vadd.f32 %v1066, %v1052
      %v1068 = vadd.f32 %v1067, %v1053
      %v1069 = vadd.f32 %v1068, %v1054
      %v1070 = vadd.f32 %v1069, %v1055
      %v1071 = vadd.f32 %v1070, %v1056
      %v1072 = vadd.f32 %v1071, %v1057
      %v1073 = vadd.f32 %v1072, %v1058
      %v1074 = vadd.f32 %v1073, %v1059
      %v1075 = vrot.slane %v1074, 4
      %v1076 = vadd.f32 %v1074, %v1075
      %v1077 = vrot.slane %v1076, 2
      %v1078 = vadd.f32 %v1076, %v1077
      %v1079 = vrot.slane %v1078, 1
      %v1080 = vadd.f32 %v1078, %v1079
      %vm1081 = vcmask 1040384
      %v1082 = vsel %vm1081, %v1043, %v1080
      %vm1083 = vcmask 1041408
      %v1084 = vsel %vm1083, %v1082, 0.0
      %1085 = vst [vmem:[%s347] sm:$0xff] %v1084
      %s1086 = smul.u32 16, %s22
      %p1087 = scmp.lt.s32.totalorder %s21, 1
      %s1088 = scalar_select %p1087, %s21, 1
      %p1089 = scmp.lt.s32.totalorder %s1086, 15
      %s1090 = scalar_select %p1089, %s1086, 15
      %s1091 = smul.addr %s1088, 16
      %s1092 = sadd.s32 %s1090, %s1091
      %s1093 = smul.addr %s1092, 4
      %s1094 = scalar_lea.vmem %s4, %s1093
      %p1095 = scmp.lt.s32.totalorder %s21, 1
      %s1096 = scalar_select %p1095, %s21, 1
      %p1097 = scmp.lt.s32.totalorder %s22, 0
      %s1098 = scalar_select %p1097, %s22, 0
      %s1099 = sadd.s32 %s1098, %s1096
      %s1100 = smul.addr %s1099, 8
      %s1101 = scalar_lea.vmem %s5, %s1100
      // Predicated region
      $region37: #{_lambda_.6} parent=35 // pred_check
        %p1102 = pneg %p151
      $region38: #{_lambda_.6} parent=35 // pred_check_branch
        %1104 = sbr.rel (%p1102) target = $region40
      $region39: #{_lambda_.6} parent=35 // pred_region
        %s1105 = smul.u32 16, %s22
      $region40: #{_lambda_.6} parent=35 // pred_fallthru
        _
      // Predicated region
      $region41: #{_lambda_.6} parent=35 // pred_check
        %p1106 = pneg %p179
      $region42: #{_lambda_.6} parent=35 // pred_check_branch
        %1108 = sbr.rel (%p1106) target = $region44
      $region43: #{_lambda_.6} parent=35 // pred_region
        _
      $region44: #{_lambda_.6} parent=35 // pred_fallthru
        _
    $region36: #{_lambda_.6} parent=5 // pred_fallthru
      _
    %p1109 = scmp.le.s32.totalorder 2, %s12
    // Predicated region
    $region45: #{_lambda_.6} parent=5 // pred_check
      %p1110 = pneg %p1109
    $region46: #{_lambda_.6} parent=5 // pred_check_branch
      %1112 = sbr.rel (%p1110) target = $region48
    $region47: #{_lambda_.6} parent=5 // pred_region
      %s1113 = ssub.s32 %s12, 2
      // Predicated region
      $region49: #{_lambda_.6} parent=47 // pred_check
        %p1114 = pneg %p157
      $region50: #{_lambda_.6} parent=47 // pred_check_branch
        %1116 = sbr.rel (%p1114) target = $region52
      $region51: #{_lambda_.6} parent=47 // pred_region
        %s1117 = smul.u32 16, %s24
        %p1118 = scmp.lt.s32.totalorder %s23, 1
        %s1119 = scalar_select %p1118, %s23, 1
        %p1120 = scmp.lt.s32.totalorder %s1117, 15
        %s1121 = scalar_select %p1120, %s1117, 15
        %s1122 = smul.addr %s1119, 16
        %s1123 = sadd.s32 %s1121, %s1122
        %s1124 = smul.addr %s1123, 4
        %s1125 = scalar_lea.vmem %s4, %s1124
      $region52: #{_lambda_.6} parent=47 // pred_fallthru
        _
      // Predicated region
      $region53: #{_lambda_.6} parent=47 // pred_check
        %p1126 = pneg %p185
      $region54: #{_lambda_.6} parent=47 // pred_check_branch
        %1128 = sbr.rel (%p1126) target = $region56
      $region55: #{_lambda_.6} parent=47 // pred_region
        %p1129 = scmp.lt.s32.totalorder %s23, 1
        %s1130 = scalar_select %p1129, %s23, 1
        %p1131 = scmp.lt.s32.totalorder %s24, 0
        %s1132 = scalar_select %p1131, %s24, 0
        %s1133 = sadd.s32 %s1132, %s1130
        %s1134 = smul.addr %s1133, 8
        %s1135 = scalar_lea.vmem %s5, %s1134
      $region56: #{_lambda_.6} parent=47 // pred_fallthru
        _
    $region48: #{_lambda_.6} parent=5 // pred_fallthru
      _
  $region6: #{_lambda_.6} parent=0 // loop_footer
    %s16 = sadd.s32 1, %s12
  $region7: #{_lambda_.6} parent=0 // loop_footer_branch
    %11 = sbr.rel target = $region3
  $region8: #{_lambda_.6} parent=0 // loop_exit
    _

</llo_original>
